<compile_context>
chip_gen: v7x
topology: tpu7x:2x2x1
jax: 0.10.0
libtpu: 0.0.40
codegen_flags: <defaults>
</compile_context>

<pallas_src>
import jax
import jax.numpy as jnp
import numpy as np
from jax.experimental import pallas as pl
from jax.experimental.pallas import tpu as pltpu


# Mirrors config['CommandLevelLSTMContinuous']
CONFIG = dict(
    num_tokens=8,        # unused in forward
    token_dim=64,        # embedding vocabulary size
    embedding_dim=16,
    hidden_dim=32,
    n_layers=2,
    dropout=0.0,         # eval-mode forward: dropout is a no-op
    n_bytes=2,           # conv1d kernel size / stride
)

_SUBLANE = 8
_LANE = 128


def make_kernel(L, T, Bp, H):
    """Fused stacked-LSTM (wavefronted) + (dense -> conv1d -> sigmoid) kernel.

    Inputs (all VMEM):
      x_ref            [T*Bp, E]     time-major embedded tokens (row t*Bp + b)
      per layer l:     wih_l [in, 4H], whh_l [H, 4H], b_l [1, 4H] (b_ih+b_hh)
      wf               [T*H, OUTL]   host-prefused dense+conv weight (lane padded)
      bf               [1, OUTL]     host-prefused dense+conv bias
    Output:
      out_ref          [Bp, OUTL]    lane-dense slab; wrapper slices [B, T_out]
    Scratch:
      pg_ref           [T*Bp, 4H]    hoisted layer-0 input-projection pre-gates
      hcat_ref         [Bp, T*H]     lane-dense last-layer hidden states
    """

    def kernel(x_ref, *refs):
        wf_ref = refs[3 * L]
        bf_ref = refs[3 * L + 1]
        out_ref = refs[3 * L + 2]
        pg_ref = refs[3 * L + 3]
        hcat_ref = refs[3 * L + 4]

        wih = [refs[3 * l][...] for l in range(L)]        # [in_dim, 4H]
        whh = [refs[3 * l + 1][...] for l in range(L)]    # [H, 4H]
        b = [refs[3 * l + 2][...] for l in range(L)]      # [1, 4H]

        # ---- hoisted layer-0 input projection: ONE batched matmul, bias
        #      folded in (keeps only h@Whh on the serial recurrence path). ----
        pg_ref[...] = (
            jnp.dot(x_ref[...], wih[0], preferred_element_type=jnp.float32)
            + b[0])

        # Hoisted sublane-broadcast of the per-layer bias for l > 0.
        bb = [jnp.broadcast_to(b[l], (Bp, 4 * H)) for l in range(1, L)]

        def cell(gates, c_prev):
            # one full-width sigmoid push + one tanh push on the g block
            sig = jax.nn.sigmoid(gates)                    # [Bp, 4H]
            gg = jnp.tanh(gates[:, 2 * H:3 * H])
            c_new = sig[:, H:2 * H] * c_prev + sig[:, 0:H] * gg
            h_new = sig[:, 3 * H:4 * H] * jnp.tanh(c_new)
            return h_new, c_new

        zeros = jnp.zeros((Bp, H), jnp.float32)
        h = [zeros] * L
        c = [zeros] * L

        # ---- wavefront: diagonal step d runs layer l on timestep t = d - l.
        #      All inputs come from the previous diagonal's carries, so the
        #      L small matmuls per step are independent (pipelined MXU). ------
        for d in range(T + L - 1):
            h_in = list(h)
            c_in = list(c)
            for l in range(L):
                t = d - l
                if not (0 <= t < T):
                    continue
                if l == 0:
                    pre = pg_ref[pl.ds(t * Bp, Bp), :]         # aligned 8-row tile
                else:
                    pre = (jnp.dot(h_in[l - 1], wih[l],
                                   preferred_element_type=jnp.float32)
                           + bb[l - 1])
                gates = pre + jnp.dot(h_in[l], whh[l],
                                      preferred_element_type=jnp.float32)
                h[l], c[l] = cell(gates, c_in[l])
                if l == L - 1:
                    hcat_ref[:, pl.ds(t * H, H)] = h[l]        # lane-dense stash

        # ---- fused dense(H->1) + conv1d(k=stride=nb) + sigmoid:
        #      one lane-dense matmul + one EUP sigmoid + one full-tile store. -
        out_ref[...] = jax.nn.sigmoid(
            jnp.dot(hcat_ref[...], wf_ref[...],
                    preferred_element_type=jnp.float32)
            + bf_ref[...])

    return kernel


def init_params(key, cfg):
    """Deterministic synthetic parameters matching the PyTorch module shapes.

    LSTM / Linear weights are stored pre-transposed ([in, out]) so the kernel
    can do row-major x @ W on the MXU."""
    E, H, L = cfg['embedding_dim'], cfg['hidden_dim'], cfg['n_layers']
    V, nb = cfg['token_dim'], cfg['n_bytes']
    ks = iter(jax.random.split(key, 4 * L + 8))
    uni = lambda k, shape, bnd: jax.random.uniform(k, shape, jnp.float32, -bnd, bnd)

    p = {}
    p['embedding'] = jax.random.normal(next(ks), (V, E), jnp.float32)
    kb = 1.0 / np.sqrt(H)
    for l in range(L):
        in_dim = E if l == 0 else H
        p[f'wih_{l}'] = uni(next(ks), (in_dim, 4 * H), kb)   # (weight_ih_l{l}).T
        p[f'whh_{l}'] = uni(next(ks), (H, 4 * H), kb)        # (weight_hh_l{l}).T
        bih = uni(next(ks), (1, 4 * H), kb)
        bhh = uni(next(ks), (1, 4 * H), kb)
        p[f'b_{l}'] = bih + bhh
    p['wd'] = uni(next(ks), (H, 1), kb)                      # dense.weight.T
    p['bd'] = uni(next(ks), (1, 1), kb)                      # dense.bias
    if nb == 1:
        # module uses nn.Identity() when n_bytes == 1 (sigmoid still applied)
        p['wc'] = jnp.ones((1, 1), jnp.float32)
        p['bc'] = jnp.zeros((1, 1), jnp.float32)
    else:
        kc = 1.0 / np.sqrt(nb)
        p['wc'] = uni(next(ks), (1, nb), kc)                 # conv1d.weight[0,0,:]
        p['bc'] = uni(next(ks), (1, 1), kc)                  # conv1d.bias
    return p


def _build_fused_head_np(params, T, H, nb, out_lanes):
    """Host-side (numpy) fusion of dense(H->1) + conv1d(k=stride=nb).

    W_f[t*H + i, j] = wc[t - j*nb] * wd[i]  if j*nb <= t < (j+1)*nb else 0
    b_f[j]          = bd * sum(wc) + bc     for j < T_out, else 0
    so  sigmoid(Hcat @ W_f + b_f)[:, :T_out] == sigmoid(conv1d(dense(h)))."""
    T_out = T // nb
    wd = np.asarray(params['wd'], np.float32)[:, 0]      # [H]
    bd = float(np.asarray(params['bd'])[0, 0])
    wc = np.asarray(params['wc'], np.float32)[0]         # [nb]
    bc = float(np.asarray(params['bc'])[0, 0])
    wf = np.zeros((T, H, out_lanes), np.float32)
    for j in range(T_out):
        for k in range(nb):
            wf[j * nb + k, :, j] = wc[k] * wd
    wf = wf.reshape(T * H, out_lanes)
    bf = np.zeros((1, out_lanes), np.float32)
    bf[0, :T_out] = bd * float(wc.sum()) + bc
    return wf, bf


def build_forward(params, cfg, B, T):
    """Builds a jitted forward(tokens) -> [B, T//n_bytes] for fixed shapes."""
    E, H = cfg['embedding_dim'], cfg['hidden_dim']
    L, nb = cfg['n_layers'], cfg['n_bytes']
    assert T % nb == 0, "T must be divisible by n_bytes (stride==kernel conv)"
    T_out = T // nb
    Bp = ((B + _SUBLANE - 1) // _SUBLANE) * _SUBLANE          # pad batch to 8
    out_lanes = ((T_out + _LANE - 1) // _LANE) * _LANE        # lane-dense output

    wf_np, bf_np = _build_fused_head_np(params, T, H, nb, out_lanes)

    flat = []
    for l in range(L):
        flat += [params[f'wih_{l}'], params[f'whh_{l}'], params[f'b_{l}']]
    flat += [wf_np, bf_np]
    flat = [jnp.asarray(a, jnp.float32) for a in flat]

    kernel = make_kernel(L, T, Bp, H)
    n_in = 1 + len(flat)
    pcall = pl.pallas_call(
        kernel,
        out_shape=jax.ShapeDtypeStruct((Bp, out_lanes), jnp.float32),
        in_specs=[pl.BlockSpec(memory_space=pltpu.MemorySpace.VMEM)] * n_in,
        out_specs=pl.BlockSpec(memory_space=pltpu.MemorySpace.VMEM),
        scratch_shapes=[
            pltpu.VMEM((T * Bp, 4 * H), jnp.float32),   # hoisted layer-0 pre-gates
            pltpu.VMEM((Bp, T * H), jnp.float32),       # lane-dense hidden concat
        ],
        compiler_params=pltpu.CompilerParams(vmem_limit_bytes=32 * 1024 * 1024),
    )

    emb_table = jnp.asarray(params['embedding'], jnp.float32)

    @jax.jit
    def forward(tokens):
        # Embedding gather (glue, plain JAX), time-major, batch padded to Bp.
        emb = jnp.take(emb_table, tokens.astype(jnp.int32), axis=0)   # [B,T,E]
        x_tm = jnp.transpose(emb, (1, 0, 2))                          # [T,B,E]
        x_tm = jnp.pad(x_tm, ((0, 0), (0, Bp - B), (0, 0)))           # [T,Bp,E]
        x_flat = x_tm.reshape(T * Bp, E)
        out = pcall(x_flat, *flat)                                    # [Bp,OUTL]
        return out[:B, :T_out]

    return forward


def reference(tokens, p, cfg):
    """Pure-JAX reference mirroring the PyTorch forward pass."""
    E, H, L, nb = (cfg['embedding_dim'], cfg['hidden_dim'],
                   cfg['n_layers'], cfg['n_bytes'])
    x = jnp.take(p['embedding'], tokens.astype(jnp.int32), axis=0)   # [B,T,E]
    B, T, _ = x.shape
    for l in range(L):
        h = jnp.zeros((B, H), jnp.float32)
        c = jnp.zeros((B, H), jnp.float32)
        outs = []
        for t in range(T):
            g = x[:, t, :] @ p[f'wih_{l}'] + h @ p[f'whh_{l}'] + p[f'b_{l}']
            i = jax.nn.sigmoid(g[:, :H])
            f = jax.nn.sigmoid(g[:, H:2 * H])
            gg = jnp.tanh(g[:, 2 * H:3 * H])
            o = jax.nn.sigmoid(g[:, 3 * H:])
            c = f * c + i * gg
            h = o * jnp.tanh(c)
            outs.append(h)
        x = jnp.stack(outs, axis=1)                                  # [B,T,H]
    d = (x @ p['wd'])[..., 0] + p['bd'][0, 0]                        # [B,T]
    dr = d.reshape(B, T // nb, nb)
    conv = jnp.sum(dr * p['wc'][0][None, None, :], axis=-1) + p['bc'][0, 0]
    return jax.nn.sigmoid(conv)                                      # [B,T//nb]


if __name__ == "__main__":
    cfg = CONFIG
    B, T = 2, 8
    key = jax.random.PRNGKey(0)
    k_tok, k_par = jax.random.split(key)

    tokens = jax.random.randint(k_tok, (B, T), 0, cfg['token_dim'],
                                dtype=jnp.int32)
    params = init_params(k_par, cfg)

    forward = build_forward(params, cfg, B, T)
    out = jax.block_until_ready(forward(tokens))

    ref = jax.block_until_ready(reference(tokens, params, cfg))
    np.testing.assert_allclose(np.asarray(out), np.asarray(ref),
                               rtol=1e-4, atol=1e-4)
    assert out.shape == (B, T // cfg['n_bytes'])
    print("KERNEL_OK")
</pallas_src>

<mosaic_0001>
module attributes {stable_mosaic.version = 11 : i64} {
  func.func @kernel(%arg0: memref<64x16xf32, #tpu.memory_space<vmem>>, %arg1: memref<16x128xf32, #tpu.memory_space<vmem>>, %arg2: memref<32x128xf32, #tpu.memory_space<vmem>>, %arg3: memref<1x128xf32, #tpu.memory_space<vmem>>, %arg4: memref<32x128xf32, #tpu.memory_space<vmem>>, %arg5: memref<32x128xf32, #tpu.memory_space<vmem>>, %arg6: memref<1x128xf32, #tpu.memory_space<vmem>>, %arg7: memref<256x128xf32, #tpu.memory_space<vmem>>, %arg8: memref<1x128xf32, #tpu.memory_space<vmem>>, %arg9: memref<8x128xf32, #tpu.memory_space<vmem>>, %arg10: memref<64x128xf32, #tpu.memory_space<vmem>>, %arg11: memref<8x256xf32, #tpu.memory_space<vmem>>) attributes {dimension_semantics = [], scalar_prefetch = 0 : i64, scratch_operands = 2 : i64, tpu.core_type = #tpu.core_type<tc>} {
    %c0 = arith.constant 0 : index
    %c0_0 = arith.constant 0 : index
    %0 = vector.load %arg1[%c0, %c0_0] : memref<16x128xf32, #tpu.memory_space<vmem>>, vector<16x128xf32>
    %c0_1 = arith.constant 0 : index
    %c0_2 = arith.constant 0 : index
    %1 = vector.load %arg4[%c0_1, %c0_2] : memref<32x128xf32, #tpu.memory_space<vmem>>, vector<32x128xf32>
    %c0_3 = arith.constant 0 : index
    %c0_4 = arith.constant 0 : index
    %2 = vector.load %arg2[%c0_3, %c0_4] : memref<32x128xf32, #tpu.memory_space<vmem>>, vector<32x128xf32>
    %c0_5 = arith.constant 0 : index
    %c0_6 = arith.constant 0 : index
    %3 = vector.load %arg5[%c0_5, %c0_6] : memref<32x128xf32, #tpu.memory_space<vmem>>, vector<32x128xf32>
    %c0_7 = arith.constant 0 : index
    %c0_8 = arith.constant 0 : index
    %4 = vector.load %arg3[%c0_7, %c0_8] : memref<1x128xf32, #tpu.memory_space<vmem>>, vector<1x128xf32>
    %c0_9 = arith.constant 0 : index
    %c0_10 = arith.constant 0 : index
    %5 = vector.load %arg6[%c0_9, %c0_10] : memref<1x128xf32, #tpu.memory_space<vmem>>, vector<1x128xf32>
    %c0_11 = arith.constant 0 : index
    %c0_12 = arith.constant 0 : index
    %6 = vector.load %arg0[%c0_11, %c0_12] : memref<64x16xf32, #tpu.memory_space<vmem>>, vector<64x16xf32>
    %cst = arith.constant dense<0.000000e+00> : vector<64x128xf32>
    %7 = tpu.matmul %6, %0, %cst {dimension_numbers = #tpu.dot_dimension_numbers<[1], [0], [0], [1], [0, 0, 1, 1], [], []>} : vector<64x16xf32>, vector<16x128xf32>, vector<64x128xf32> -> vector<64x128xf32>
    %8 = vector.broadcast %4 : vector<1x128xf32> to vector<64x128xf32>
    %9 = arith.addf %7, %8 : vector<64x128xf32>
    %c0_13 = arith.constant 0 : index
    %c0_14 = arith.constant 0 : index
    %10 = vector.load %arg10[%c0_13, %c0_14] : memref<64x128xf32, #tpu.memory_space<vmem>>, vector<64x128xf32>
    tpu.vector_store %arg10[%c0_13, %c0_14], %9 {strides = array<i32>} : memref<64x128xf32, #tpu.memory_space<vmem>>, vector<64x128xf32>,
    %11 = vector.shape_cast %5 : vector<1x128xf32> to vector<1x128xf32>
    %12 = vector.broadcast %11 : vector<1x128xf32> to vector<8x128xf32>
    %cst_15 = arith.constant 0.000000e+00 : f32
    %13 = vector.broadcast %cst_15 : f32 to vector<8x32xf32>
    %c0_16 = arith.constant 0 : index
    %c0_17 = arith.constant 0 : index
    %14 = vector.load %arg10[%c0_16, %c0_17] : memref<64x128xf32, #tpu.memory_space<vmem>>, vector<8x128xf32>
    %cst_18 = arith.constant dense<0.000000e+00> : vector<8x128xf32>
    %15 = tpu.matmul %13, %2, %cst_18 {dimension_numbers = #tpu.dot_dimension_numbers<[1], [0], [0], [1], [0, 0, 1, 1], [], []>} : vector<8x32xf32>, vector<32x128xf32>, vector<8x128xf32> -> vector<8x128xf32>
    %16 = arith.addf %14, %15 : vector<8x128xf32>
    %17 = arith.negf %16 : vector<8x128xf32>
    %18 = math.exp %17 : vector<8x128xf32>
    %cst_19 = arith.constant 1.000000e+00 : f32
    %19 = vector.broadcast %cst_19 : f32 to vector<8x128xf32>
    %20 = arith.addf %19, %18 : vector<8x128xf32>
    %21 = arith.divf %19, %20 : vector<8x128xf32>
    %22 = vector.extract_strided_slice %16 {offsets = [0, 64], sizes = [8, 32], strides = [1, 1]} : vector<8x128xf32> to vector<8x32xf32>
    %23 = math.tanh %22 : vector<8x32xf32>
    %24 = vector.extract_strided_slice %21 {offsets = [0, 32], sizes = [8, 32], strides = [1, 1]} : vector<8x128xf32> to vector<8x32xf32>
    %25 = arith.mulf %24, %13 : vector<8x32xf32>
    %26 = vector.extract_strided_slice %21 {offsets = [0, 0], sizes = [8, 32], strides = [1, 1]} : vector<8x128xf32> to vector<8x32xf32>
    %27 = arith.mulf %26, %23 : vector<8x32xf32>
    %28 = arith.addf %25, %27 : vector<8x32xf32>
    %29 = vector.extract_strided_slice %21 {offsets = [0, 96], sizes = [8, 32], strides = [1, 1]} : vector<8x128xf32> to vector<8x32xf32>
    %30 = math.tanh %28 : vector<8x32xf32>
    %31 = arith.mulf %29, %30 : vector<8x32xf32>
    %c8 = arith.constant 8 : index
    %c0_20 = arith.constant 0 : index
    %32 = vector.load %arg10[%c8, %c0_20] : memref<64x128xf32, #tpu.memory_space<vmem>>, vector<8x128xf32>
    %cst_21 = arith.constant dense<0.000000e+00> : vector<8x128xf32>
    %33 = tpu.matmul %31, %2, %cst_21 {dimension_numbers = #tpu.dot_dimension_numbers<[1], [0], [0], [1], [0, 0, 1, 1], [], []>} : vector<8x32xf32>, vector<32x128xf32>, vector<8x128xf32> -> vector<8x128xf32>
    %34 = arith.addf %32, %33 : vector<8x128xf32>
    %35 = arith.negf %34 : vector<8x128xf32>
    %36 = math.exp %35 : vector<8x128xf32>
    %cst_22 = arith.constant 1.000000e+00 : f32
    %37 = vector.broadcast %cst_22 : f32 to vector<8x128xf32>
    %38 = arith.addf %37, %36 : vector<8x128xf32>
    %39 = arith.divf %37, %38 : vector<8x128xf32>
    %40 = vector.extract_strided_slice %34 {offsets = [0, 64], sizes = [8, 32], strides = [1, 1]} : vector<8x128xf32> to vector<8x32xf32>
    %41 = math.tanh %40 : vector<8x32xf32>
    %42 = vector.extract_strided_slice %39 {offsets = [0, 32], sizes = [8, 32], strides = [1, 1]} : vector<8x128xf32> to vector<8x32xf32>
    %43 = arith.mulf %42, %28 : vector<8x32xf32>
    %44 = vector.extract_strided_slice %39 {offsets = [0, 0], sizes = [8, 32], strides = [1, 1]} : vector<8x128xf32> to vector<8x32xf32>
    %45 = arith.mulf %44, %41 : vector<8x32xf32>
    %46 = arith.addf %43, %45 : vector<8x32xf32>
    %47 = vector.extract_strided_slice %39 {offsets = [0, 96], sizes = [8, 32], strides = [1, 1]} : vector<8x128xf32> to vector<8x32xf32>
    %48 = math.tanh %46 : vector<8x32xf32>
    %49 = arith.mulf %47, %48 : vector<8x32xf32>
    %cst_23 = arith.constant dense<0.000000e+00> : vector<8x128xf32>
    %50 = tpu.matmul %31, %1, %cst_23 {dimension_numbers = #tpu.dot_dimension_numbers<[1], [0], [0], [1], [0, 0, 1, 1], [], []>} : vector<8x32xf32>, vector<32x128xf32>, vector<8x128xf32> -> vector<8x128xf32>
    %51 = arith.addf %50, %12 : vector<8x128xf32>
    %cst_24 = arith.constant dense<0.000000e+00> : vector<8x128xf32>
    %52 = tpu.matmul %13, %3, %cst_24 {dimension_numbers = #tpu.dot_dimension_numbers<[1], [0], [0], [1], [0, 0, 1, 1], [], []>} : vector<8x32xf32>, vector<32x128xf32>, vector<8x128xf32> -> vector<8x128xf32>
    %53 = arith.addf %51, %52 : vector<8x128xf32>
    %54 = arith.negf %53 : vector<8x128xf32>
    %55 = math.exp %54 : vector<8x128xf32>
    %cst_25 = arith.constant 1.000000e+00 : f32
    %56 = vector.broadcast %cst_25 : f32 to vector<8x128xf32>
    %57 = arith.addf %56, %55 : vector<8x128xf32>
    %58 = arith.divf %56, %57 : vector<8x128xf32>
    %59 = vector.extract_strided_slice %53 {offsets = [0, 64], sizes = [8, 32], strides = [1, 1]} : vector<8x128xf32> to vector<8x32xf32>
    %60 = math.tanh %59 : vector<8x32xf32>
    %61 = vector.extract_strided_slice %58 {offsets = [0, 32], sizes = [8, 32], strides = [1, 1]} : vector<8x128xf32> to vector<8x32xf32>
    %62 = arith.mulf %61, %13 : vector<8x32xf32>
    %63 = vector.extract_strided_slice %58 {offsets = [0, 0], sizes = [8, 32], strides = [1, 1]} : vector<8x128xf32> to vector<8x32xf32>
    %64 = arith.mulf %63, %60 : vector<8x32xf32>
    %65 = arith.addf %62, %64 : vector<8x32xf32>
    %66 = vector.extract_strided_slice %58 {offsets = [0, 96], sizes = [8, 32], strides = [1, 1]} : vector<8x128xf32> to vector<8x32xf32>
    %67 = math.tanh %65 : vector<8x32xf32>
    %68 = arith.mulf %66, %67 : vector<8x32xf32>
    %c0_26 = arith.constant 0 : index
    %c0_27 = arith.constant 0 : index
    %69 = vector.load %arg11[%c0_26, %c0_27] : memref<8x256xf32, #tpu.memory_space<vmem>>, vector<8x32xf32>
    tpu.vector_store %arg11[%c0_26, %c0_27], %68 {strides = array<i32>} : memref<8x256xf32, #tpu.memory_space<vmem>>, vector<8x32xf32>,
    %c16 = arith.constant 16 : index
    %c0_28 = arith.constant 0 : index
    %70 = vector.load %arg10[%c16, %c0_28] : memref<64x128xf32, #tpu.memory_space<vmem>>, vector<8x128xf32>
    %cst_29 = arith.constant dense<0.000000e+00> : vector<8x128xf32>
    %71 = tpu.matmul %49, %2, %cst_29 {dimension_numbers = #tpu.dot_dimension_numbers<[1], [0], [0], [1], [0, 0, 1, 1], [], []>} : vector<8x32xf32>, vector<32x128xf32>, vector<8x128xf32> -> vector<8x128xf32>
    %72 = arith.addf %70, %71 : vector<8x128xf32>
    %73 = arith.negf %72 : vector<8x128xf32>
    %74 = math.exp %73 : vector<8x128xf32>
    %cst_30 = arith.constant 1.000000e+00 : f32
    %75 = vector.broadcast %cst_30 : f32 to vector<8x128xf32>
    %76 = arith.addf %75, %74 : vector<8x128xf32>
    %77 = arith.divf %75, %76 : vector<8x128xf32>
    %78 = vector.extract_strided_slice %72 {offsets = [0, 64], sizes = [8, 32], strides = [1, 1]} : vector<8x128xf32> to vector<8x32xf32>
    %79 = math.tanh %78 : vector<8x32xf32>
    %80 = vector.extract_strided_slice %77 {offsets = [0, 32], sizes = [8, 32], strides = [1, 1]} : vector<8x128xf32> to vector<8x32xf32>
    %81 = arith.mulf %80, %46 : vector<8x32xf32>
    %82 = vector.extract_strided_slice %77 {offsets = [0, 0], sizes = [8, 32], strides = [1, 1]} : vector<8x128xf32> to vector<8x32xf32>
    %83 = arith.mulf %82, %79 : vector<8x32xf32>
    %84 = arith.addf %81, %83 : vector<8x32xf32>
    %85 = vector.extract_strided_slice %77 {offsets = [0, 96], sizes = [8, 32], strides = [1, 1]} : vector<8x128xf32> to vector<8x32xf32>
    %86 = math.tanh %84 : vector<8x32xf32>
    %87 = arith.mulf %85, %86 : vector<8x32xf32>
    %cst_31 = arith.constant dense<0.000000e+00> : vector<8x128xf32>
    %88 = tpu.matmul %49, %1, %cst_31 {dimension_numbers = #tpu.dot_dimension_numbers<[1], [0], [0], [1], [0, 0, 1, 1], [], []>} : vector<8x32xf32>, vector<32x128xf32>, vector<8x128xf32> -> vector<8x128xf32>
    %89 = arith.addf %88, %12 : vector<8x128xf32>
    %cst_32 = arith.constant dense<0.000000e+00> : vector<8x128xf32>
    %90 = tpu.matmul %68, %3, %cst_32 {dimension_numbers = #tpu.dot_dimension_numbers<[1], [0], [0], [1], [0, 0, 1, 1], [], []>} : vector<8x32xf32>, vector<32x128xf32>, vector<8x128xf32> -> vector<8x128xf32>
    %91 = arith.addf %89, %90 : vector<8x128xf32>
    %92 = arith.negf %91 : vector<8x128xf32>
    %93 = math.exp %92 : vector<8x128xf32>
    %cst_33 = arith.constant 1.000000e+00 : f32
    %94 = vector.broadcast %cst_33 : f32 to vector<8x128xf32>
    %95 = arith.addf %94, %93 : vector<8x128xf32>
    %96 = arith.divf %94, %95 : vector<8x128xf32>
    %97 = vector.extract_strided_slice %91 {offsets = [0, 64], sizes = [8, 32], strides = [1, 1]} : vector<8x128xf32> to vector<8x32xf32>
    %98 = math.tanh %97 : vector<8x32xf32>
    %99 = vector.extract_strided_slice %96 {offsets = [0, 32], sizes = [8, 32], strides = [1, 1]} : vector<8x128xf32> to vector<8x32xf32>
    %100 = arith.mulf %99, %65 : vector<8x32xf32>
    %101 = vector.extract_strided_slice %96 {offsets = [0, 0], sizes = [8, 32], strides = [1, 1]} : vector<8x128xf32> to vector<8x32xf32>
    %102 = arith.mulf %101, %98 : vector<8x32xf32>
    %103 = arith.addf %100, %102 : vector<8x32xf32>
    %104 = vector.extract_strided_slice %96 {offsets = [0, 96], sizes = [8, 32], strides = [1, 1]} : vector<8x128xf32> to vector<8x32xf32>
    %105 = math.tanh %103 : vector<8x32xf32>
    %106 = arith.mulf %104, %105 : vector<8x32xf32>
    %c0_34 = arith.constant 0 : index
    %c32 = arith.constant 32 : index
    %107 = vector.load %arg11[%c0_34, %c32] : memref<8x256xf32, #tpu.memory_space<vmem>>, vector<8x32xf32>
    tpu.vector_store %arg11[%c0_34, %c32], %106 {strides = array<i32>} : memref<8x256xf32, #tpu.memory_space<vmem>>, vector<8x32xf32>,
    %c24 = arith.constant 24 : index
    %c0_35 = arith.constant 0 : index
    %108 = vector.load %arg10[%c24, %c0_35] : memref<64x128xf32, #tpu.memory_space<vmem>>, vector<8x128xf32>
    %cst_36 = arith.constant dense<0.000000e+00> : vector<8x128xf32>
    %109 = tpu.matmul %87, %2, %cst_36 {dimension_numbers = #tpu.dot_dimension_numbers<[1], [0], [0], [1], [0, 0, 1, 1], [], []>} : vector<8x32xf32>, vector<32x128xf32>, vector<8x128xf32> -> vector<8x128xf32>
    %110 = arith.addf %108, %109 : vector<8x128xf32>
    %111 = arith.negf %110 : vector<8x128xf32>
    %112 = math.exp %111 : vector<8x128xf32>
    %cst_37 = arith.constant 1.000000e+00 : f32
    %113 = vector.broadcast %cst_37 : f32 to vector<8x128xf32>
    %114 = arith.addf %113, %112 : vector<8x128xf32>
    %115 = arith.divf %113, %114 : vector<8x128xf32>
    %116 = vector.extract_strided_slice %110 {offsets = [0, 64], sizes = [8, 32], strides = [1, 1]} : vector<8x128xf32> to vector<8x32xf32>
    %117 = math.tanh %116 : vector<8x32xf32>
    %118 = vector.extract_strided_slice %115 {offsets = [0, 32], sizes = [8, 32], strides = [1, 1]} : vector<8x128xf32> to vector<8x32xf32>
    %119 = arith.mulf %118, %84 : vector<8x32xf32>
    %120 = vector.extract_strided_slice %115 {offsets = [0, 0], sizes = [8, 32], strides = [1, 1]} : vector<8x128xf32> to vector<8x32xf32>
    %121 = arith.mulf %120, %117 : vector<8x32xf32>
    %122 = arith.addf %119, %121 : vector<8x32xf32>
    %123 = vector.extract_strided_slice %115 {offsets = [0, 96], sizes = [8, 32], strides = [1, 1]} : vector<8x128xf32> to vector<8x32xf32>
    %124 = math.tanh %122 : vector<8x32xf32>
    %125 = arith.mulf %123, %124 : vector<8x32xf32>
    %cst_38 = arith.constant dense<0.000000e+00> : vector<8x128xf32>
    %126 = tpu.matmul %87, %1, %cst_38 {dimension_numbers = #tpu.dot_dimension_numbers<[1], [0], [0], [1], [0, 0, 1, 1], [], []>} : vector<8x32xf32>, vector<32x128xf32>, vector<8x128xf32> -> vector<8x128xf32>
    %127 = arith.addf %126, %12 : vector<8x128xf32>
    %cst_39 = arith.constant dense<0.000000e+00> : vector<8x128xf32>
    %128 = tpu.matmul %106, %3, %cst_39 {dimension_numbers = #tpu.dot_dimension_numbers<[1], [0], [0], [1], [0, 0, 1, 1], [], []>} : vector<8x32xf32>, vector<32x128xf32>, vector<8x128xf32> -> vector<8x128xf32>
    %129 = arith.addf %127, %128 : vector<8x128xf32>
    %130 = arith.negf %129 : vector<8x128xf32>
    %131 = math.exp %130 : vector<8x128xf32>
    %cst_40 = arith.constant 1.000000e+00 : f32
    %132 = vector.broadcast %cst_40 : f32 to vector<8x128xf32>
    %133 = arith.addf %132, %131 : vector<8x128xf32>
    %134 = arith.divf %132, %133 : vector<8x128xf32>
    %135 = vector.extract_strided_slice %129 {offsets = [0, 64], sizes = [8, 32], strides = [1, 1]} : vector<8x128xf32> to vector<8x32xf32>
    %136 = math.tanh %135 : vector<8x32xf32>
    %137 = vector.extract_strided_slice %134 {offsets = [0, 32], sizes = [8, 32], strides = [1, 1]} : vector<8x128xf32> to vector<8x32xf32>
    %138 = arith.mulf %137, %103 : vector<8x32xf32>
    %139 = vector.extract_strided_slice %134 {offsets = [0, 0], sizes = [8, 32], strides = [1, 1]} : vector<8x128xf32> to vector<8x32xf32>
    %140 = arith.mulf %139, %136 : vector<8x32xf32>
    %141 = arith.addf %138, %140 : vector<8x32xf32>
    %142 = vector.extract_strided_slice %134 {offsets = [0, 96], sizes = [8, 32], strides = [1, 1]} : vector<8x128xf32> to vector<8x32xf32>
    %143 = math.tanh %141 : vector<8x32xf32>
    %144 = arith.mulf %142, %143 : vector<8x32xf32>
    %c0_41 = arith.constant 0 : index
    %c64 = arith.constant 64 : index
    %145 = vector.load %arg11[%c0_41, %c64] : memref<8x256xf32, #tpu.memory_space<vmem>>, vector<8x32xf32>
    tpu.vector_store %arg11[%c0_41, %c64], %144 {strides = array<i32>} : memref<8x256xf32, #tpu.memory_space<vmem>>, vector<8x32xf32>,
    %c32_42 = arith.constant 32 : index
    %c0_43 = arith.constant 0 : index
    %146 = vector.load %arg10[%c32_42, %c0_43] : memref<64x128xf32, #tpu.memory_space<vmem>>, vector<8x128xf32>
    %cst_44 = arith.constant dense<0.000000e+00> : vector<8x128xf32>
    %147 = tpu.matmul %125, %2, %cst_44 {dimension_numbers = #tpu.dot_dimension_numbers<[1], [0], [0], [1], [0, 0, 1, 1], [], []>} : vector<8x32xf32>, vector<32x128xf32>, vector<8x128xf32> -> vector<8x128xf32>
    %148 = arith.addf %146, %147 : vector<8x128xf32>
    %149 = arith.negf %148 : vector<8x128xf32>
    %150 = math.exp %149 : vector<8x128xf32>
    %cst_45 = arith.constant 1.000000e+00 : f32
    %151 = vector.broadcast %cst_45 : f32 to vector<8x128xf32>
    %152 = arith.addf %151, %150 : vector<8x128xf32>
    %153 = arith.divf %151, %152 : vector<8x128xf32>
    %154 = vector.extract_strided_slice %148 {offsets = [0, 64], sizes = [8, 32], strides = [1, 1]} : vector<8x128xf32> to vector<8x32xf32>
    %155 = math.tanh %154 : vector<8x32xf32>
    %156 = vector.extract_strided_slice %153 {offsets = [0, 32], sizes = [8, 32], strides = [1, 1]} : vector<8x128xf32> to vector<8x32xf32>
    %157 = arith.mulf %156, %122 : vector<8x32xf32>
    %158 = vector.extract_strided_slice %153 {offsets = [0, 0], sizes = [8, 32], strides = [1, 1]} : vector<8x128xf32> to vector<8x32xf32>
    %159 = arith.mulf %158, %155 : vector<8x32xf32>
    %160 = arith.addf %157, %159 : vector<8x32xf32>
    %161 = vector.extract_strided_slice %153 {offsets = [0, 96], sizes = [8, 32], strides = [1, 1]} : vector<8x128xf32> to vector<8x32xf32>
    %162 = math.tanh %160 : vector<8x32xf32>
    %163 = arith.mulf %161, %162 : vector<8x32xf32>
    %cst_46 = arith.constant dense<0.000000e+00> : vector<8x128xf32>
    %164 = tpu.matmul %125, %1, %cst_46 {dimension_numbers = #tpu.dot_dimension_numbers<[1], [0], [0], [1], [0, 0, 1, 1], [], []>} : vector<8x32xf32>, vector<32x128xf32>, vector<8x128xf32> -> vector<8x128xf32>
    %165 = arith.addf %164, %12 : vector<8x128xf32>
    %cst_47 = arith.constant dense<0.000000e+00> : vector<8x128xf32>
    %166 = tpu.matmul %144, %3, %cst_47 {dimension_numbers = #tpu.dot_dimension_numbers<[1], [0], [0], [1], [0, 0, 1, 1], [], []>} : vector<8x32xf32>, vector<32x128xf32>, vector<8x128xf32> -> vector<8x128xf32>
    %167 = arith.addf %165, %166 : vector<8x128xf32>
    %168 = arith.negf %167 : vector<8x128xf32>
    %169 = math.exp %168 : vector<8x128xf32>
    %cst_48 = arith.constant 1.000000e+00 : f32
    %170 = vector.broadcast %cst_48 : f32 to vector<8x128xf32>
    %171 = arith.addf %170, %169 : vector<8x128xf32>
    %172 = arith.divf %170, %171 : vector<8x128xf32>
    %173 = vector.extract_strided_slice %167 {offsets = [0, 64], sizes = [8, 32], strides = [1, 1]} : vector<8x128xf32> to vector<8x32xf32>
    %174 = math.tanh %173 : vector<8x32xf32>
    %175 = vector.extract_strided_slice %172 {offsets = [0, 32], sizes = [8, 32], strides = [1, 1]} : vector<8x128xf32> to vector<8x32xf32>
    %176 = arith.mulf %175, %141 : vector<8x32xf32>
    %177 = vector.extract_strided_slice %172 {offsets = [0, 0], sizes = [8, 32], strides = [1, 1]} : vector<8x128xf32> to vector<8x32xf32>
    %178 = arith.mulf %177, %174 : vector<8x32xf32>
    %179 = arith.addf %176, %178 : vector<8x32xf32>
    %180 = vector.extract_strided_slice %172 {offsets = [0, 96], sizes = [8, 32], strides = [1, 1]} : vector<8x128xf32> to vector<8x32xf32>
    %181 = math.tanh %179 : vector<8x32xf32>
    %182 = arith.mulf %180, %181 : vector<8x32xf32>
    %c0_49 = arith.constant 0 : index
    %c96 = arith.constant 96 : index
    %183 = vector.load %arg11[%c0_49, %c96] : memref<8x256xf32, #tpu.memory_space<vmem>>, vector<8x32xf32>
    tpu.vector_store %arg11[%c0_49, %c96], %182 {strides = array<i32>} : memref<8x256xf32, #tpu.memory_space<vmem>>, vector<8x32xf32>,
    %c40 = arith.constant 40 : index
    %c0_50 = arith.constant 0 : index
    %184 = vector.load %arg10[%c40, %c0_50] : memref<64x128xf32, #tpu.memory_space<vmem>>, vector<8x128xf32>
    %cst_51 = arith.constant dense<0.000000e+00> : vector<8x128xf32>
    %185 = tpu.matmul %163, %2, %cst_51 {dimension_numbers = #tpu.dot_dimension_numbers<[1], [0], [0], [1], [0, 0, 1, 1], [], []>} : vector<8x32xf32>, vector<32x128xf32>, vector<8x128xf32> -> vector<8x128xf32>
    %186 = arith.addf %184, %185 : vector<8x128xf32>
    %187 = arith.negf %186 : vector<8x128xf32>
    %188 = math.exp %187 : vector<8x128xf32>
    %cst_52 = arith.constant 1.000000e+00 : f32
    %189 = vector.broadcast %cst_52 : f32 to vector<8x128xf32>
    %190 = arith.addf %189, %188 : vector<8x128xf32>
    %191 = arith.divf %189, %190 : vector<8x128xf32>
    %192 = vector.extract_strided_slice %186 {offsets = [0, 64], sizes = [8, 32], strides = [1, 1]} : vector<8x128xf32> to vector<8x32xf32>
    %193 = math.tanh %192 : vector<8x32xf32>
    %194 = vector.extract_strided_slice %191 {offsets = [0, 32], sizes = [8, 32], strides = [1, 1]} : vector<8x128xf32> to vector<8x32xf32>
    %195 = arith.mulf %194, %160 : vector<8x32xf32>
    %196 = vector.extract_strided_slice %191 {offsets = [0, 0], sizes = [8, 32], strides = [1, 1]} : vector<8x128xf32> to vector<8x32xf32>
    %197 = arith.mulf %196, %193 : vector<8x32xf32>
    %198 = arith.addf %195, %197 : vector<8x32xf32>
    %199 = vector.extract_strided_slice %191 {offsets = [0, 96], sizes = [8, 32], strides = [1, 1]} : vector<8x128xf32> to vector<8x32xf32>
    %200 = math.tanh %198 : vector<8x32xf32>
    %201 = arith.mulf %199, %200 : vector<8x32xf32>
    %cst_53 = arith.constant dense<0.000000e+00> : vector<8x128xf32>
    %202 = tpu.matmul %163, %1, %cst_53 {dimension_numbers = #tpu.dot_dimension_numbers<[1], [0], [0], [1], [0, 0, 1, 1], [], []>} : vector<8x32xf32>, vector<32x128xf32>, vector<8x128xf32> -> vector<8x128xf32>
    %203 = arith.addf %202, %12 : vector<8x128xf32>
    %cst_54 = arith.constant dense<0.000000e+00> : vector<8x128xf32>
    %204 = tpu.matmul %182, %3, %cst_54 {dimension_numbers = #tpu.dot_dimension_numbers<[1], [0], [0], [1], [0, 0, 1, 1], [], []>} : vector<8x32xf32>, vector<32x128xf32>, vector<8x128xf32> -> vector<8x128xf32>
    %205 = arith.addf %203, %204 : vector<8x128xf32>
    %206 = arith.negf %205 : vector<8x128xf32>
    %207 = math.exp %206 : vector<8x128xf32>
    %cst_55 = arith.constant 1.000000e+00 : f32
    %208 = vector.broadcast %cst_55 : f32 to vector<8x128xf32>
    %209 = arith.addf %208, %207 : vector<8x128xf32>
    %210 = arith.divf %208, %209 : vector<8x128xf32>
    %211 = vector.extract_strided_slice %205 {offsets = [0, 64], sizes = [8, 32], strides = [1, 1]} : vector<8x128xf32> to vector<8x32xf32>
    %212 = math.tanh %211 : vector<8x32xf32>
    %213 = vector.extract_strided_slice %210 {offsets = [0, 32], sizes = [8, 32], strides = [1, 1]} : vector<8x128xf32> to vector<8x32xf32>
    %214 = arith.mulf %213, %179 : vector<8x32xf32>
    %215 = vector.extract_strided_slice %210 {offsets = [0, 0], sizes = [8, 32], strides = [1, 1]} : vector<8x128xf32> to vector<8x32xf32>
    %216 = arith.mulf %215, %212 : vector<8x32xf32>
    %217 = arith.addf %214, %216 : vector<8x32xf32>
    %218 = vector.extract_strided_slice %210 {offsets = [0, 96], sizes = [8, 32], strides = [1, 1]} : vector<8x128xf32> to vector<8x32xf32>
    %219 = math.tanh %217 : vector<8x32xf32>
    %220 = arith.mulf %218, %219 : vector<8x32xf32>
    %c0_56 = arith.constant 0 : index
    %c128 = arith.constant 128 : index
    %221 = vector.load %arg11[%c0_56, %c128] : memref<8x256xf32, #tpu.memory_space<vmem>>, vector<8x32xf32>
    tpu.vector_store %arg11[%c0_56, %c128], %220 {strides = array<i32>} : memref<8x256xf32, #tpu.memory_space<vmem>>, vector<8x32xf32>,
    %c48 = arith.constant 48 : index
    %c0_57 = arith.constant 0 : index
    %222 = vector.load %arg10[%c48, %c0_57] : memref<64x128xf32, #tpu.memory_space<vmem>>, vector<8x128xf32>
    %cst_58 = arith.constant dense<0.000000e+00> : vector<8x128xf32>
    %223 = tpu.matmul %201, %2, %cst_58 {dimension_numbers = #tpu.dot_dimension_numbers<[1], [0], [0], [1], [0, 0, 1, 1], [], []>} : vector<8x32xf32>, vector<32x128xf32>, vector<8x128xf32> -> vector<8x128xf32>
    %224 = arith.addf %222, %223 : vector<8x128xf32>
    %225 = arith.negf %224 : vector<8x128xf32>
    %226 = math.exp %225 : vector<8x128xf32>
    %cst_59 = arith.constant 1.000000e+00 : f32
    %227 = vector.broadcast %cst_59 : f32 to vector<8x128xf32>
    %228 = arith.addf %227, %226 : vector<8x128xf32>
    %229 = arith.divf %227, %228 : vector<8x128xf32>
    %230 = vector.extract_strided_slice %224 {offsets = [0, 64], sizes = [8, 32], strides = [1, 1]} : vector<8x128xf32> to vector<8x32xf32>
    %231 = math.tanh %230 : vector<8x32xf32>
    %232 = vector.extract_strided_slice %229 {offsets = [0, 32], sizes = [8, 32], strides = [1, 1]} : vector<8x128xf32> to vector<8x32xf32>
    %233 = arith.mulf %232, %198 : vector<8x32xf32>
    %234 = vector.extract_strided_slice %229 {offsets = [0, 0], sizes = [8, 32], strides = [1, 1]} : vector<8x128xf32> to vector<8x32xf32>
    %235 = arith.mulf %234, %231 : vector<8x32xf32>
    %236 = arith.addf %233, %235 : vector<8x32xf32>
    %237 = vector.extract_strided_slice %229 {offsets = [0, 96], sizes = [8, 32], strides = [1, 1]} : vector<8x128xf32> to vector<8x32xf32>
    %238 = math.tanh %236 : vector<8x32xf32>
    %239 = arith.mulf %237, %238 : vector<8x32xf32>
    %cst_60 = arith.constant dense<0.000000e+00> : vector<8x128xf32>
    %240 = tpu.matmul %201, %1, %cst_60 {dimension_numbers = #tpu.dot_dimension_numbers<[1], [0], [0], [1], [0, 0, 1, 1], [], []>} : vector<8x32xf32>, vector<32x128xf32>, vector<8x128xf32> -> vector<8x128xf32>
    %241 = arith.addf %240, %12 : vector<8x128xf32>
    %cst_61 = arith.constant dense<0.000000e+00> : vector<8x128xf32>
    %242 = tpu.matmul %220, %3, %cst_61 {dimension_numbers = #tpu.dot_dimension_numbers<[1], [0], [0], [1], [0, 0, 1, 1], [], []>} : vector<8x32xf32>, vector<32x128xf32>, vector<8x128xf32> -> vector<8x128xf32>
    %243 = arith.addf %241, %242 : vector<8x128xf32>
    %244 = arith.negf %243 : vector<8x128xf32>
    %245 = math.exp %244 : vector<8x128xf32>
    %cst_62 = arith.constant 1.000000e+00 : f32
    %246 = vector.broadcast %cst_62 : f32 to vector<8x128xf32>
    %247 = arith.addf %246, %245 : vector<8x128xf32>
    %248 = arith.divf %246, %247 : vector<8x128xf32>
    %249 = vector.extract_strided_slice %243 {offsets = [0, 64], sizes = [8, 32], strides = [1, 1]} : vector<8x128xf32> to vector<8x32xf32>
    %250 = math.tanh %249 : vector<8x32xf32>
    %251 = vector.extract_strided_slice %248 {offsets = [0, 32], sizes = [8, 32], strides = [1, 1]} : vector<8x128xf32> to vector<8x32xf32>
    %252 = arith.mulf %251, %217 : vector<8x32xf32>
    %253 = vector.extract_strided_slice %248 {offsets = [0, 0], sizes = [8, 32], strides = [1, 1]} : vector<8x128xf32> to vector<8x32xf32>
    %254 = arith.mulf %253, %250 : vector<8x32xf32>
    %255 = arith.addf %252, %254 : vector<8x32xf32>
    %256 = vector.extract_strided_slice %248 {offsets = [0, 96], sizes = [8, 32], strides = [1, 1]} : vector<8x128xf32> to vector<8x32xf32>
    %257 = math.tanh %255 : vector<8x32xf32>
    %258 = arith.mulf %256, %257 : vector<8x32xf32>
    %c0_63 = arith.constant 0 : index
    %c160 = arith.constant 160 : index
    %259 = vector.load %arg11[%c0_63, %c160] : memref<8x256xf32, #tpu.memory_space<vmem>>, vector<8x32xf32>
    tpu.vector_store %arg11[%c0_63, %c160], %258 {strides = array<i32>} : memref<8x256xf32, #tpu.memory_space<vmem>>, vector<8x32xf32>,
    %c56 = arith.constant 56 : index
    %c0_64 = arith.constant 0 : index
    %260 = vector.load %arg10[%c56, %c0_64] : memref<64x128xf32, #tpu.memory_space<vmem>>, vector<8x128xf32>
    %cst_65 = arith.constant dense<0.000000e+00> : vector<8x128xf32>
    %261 = tpu.matmul %239, %2, %cst_65 {dimension_numbers = #tpu.dot_dimension_numbers<[1], [0], [0], [1], [0, 0, 1, 1], [], []>} : vector<8x32xf32>, vector<32x128xf32>, vector<8x128xf32> -> vector<8x128xf32>
    %262 = arith.addf %260, %261 : vector<8x128xf32>
    %263 = arith.negf %262 : vector<8x128xf32>
    %264 = math.exp %263 : vector<8x128xf32>
    %cst_66 = arith.constant 1.000000e+00 : f32
    %265 = vector.broadcast %cst_66 : f32 to vector<8x128xf32>
    %266 = arith.addf %265, %264 : vector<8x128xf32>
    %267 = arith.divf %265, %266 : vector<8x128xf32>
    %268 = vector.extract_strided_slice %262 {offsets = [0, 64], sizes = [8, 32], strides = [1, 1]} : vector<8x128xf32> to vector<8x32xf32>
    %269 = math.tanh %268 : vector<8x32xf32>
    %270 = vector.extract_strided_slice %267 {offsets = [0, 32], sizes = [8, 32], strides = [1, 1]} : vector<8x128xf32> to vector<8x32xf32>
    %271 = arith.mulf %270, %236 : vector<8x32xf32>
    %272 = vector.extract_strided_slice %267 {offsets = [0, 0], sizes = [8, 32], strides = [1, 1]} : vector<8x128xf32> to vector<8x32xf32>
    %273 = arith.mulf %272, %269 : vector<8x32xf32>
    %274 = arith.addf %271, %273 : vector<8x32xf32>
    %275 = vector.extract_strided_slice %267 {offsets = [0, 96], sizes = [8, 32], strides = [1, 1]} : vector<8x128xf32> to vector<8x32xf32>
    %276 = math.tanh %274 : vector<8x32xf32>
    %277 = arith.mulf %275, %276 : vector<8x32xf32>
    %cst_67 = arith.constant dense<0.000000e+00> : vector<8x128xf32>
    %278 = tpu.matmul %239, %1, %cst_67 {dimension_numbers = #tpu.dot_dimension_numbers<[1], [0], [0], [1], [0, 0, 1, 1], [], []>} : vector<8x32xf32>, vector<32x128xf32>, vector<8x128xf32> -> vector<8x128xf32>
    %279 = arith.addf %278, %12 : vector<8x128xf32>
    %cst_68 = arith.constant dense<0.000000e+00> : vector<8x128xf32>
    %280 = tpu.matmul %258, %3, %cst_68 {dimension_numbers = #tpu.dot_dimension_numbers<[1], [0], [0], [1], [0, 0, 1, 1], [], []>} : vector<8x32xf32>, vector<32x128xf32>, vector<8x128xf32> -> vector<8x128xf32>
    %281 = arith.addf %279, %280 : vector<8x128xf32>
    %282 = arith.negf %281 : vector<8x128xf32>
    %283 = math.exp %282 : vector<8x128xf32>
    %cst_69 = arith.constant 1.000000e+00 : f32
    %284 = vector.broadcast %cst_69 : f32 to vector<8x128xf32>
    %285 = arith.addf %284, %283 : vector<8x128xf32>
    %286 = arith.divf %284, %285 : vector<8x128xf32>
    %287 = vector.extract_strided_slice %281 {offsets = [0, 64], sizes = [8, 32], strides = [1, 1]} : vector<8x128xf32> to vector<8x32xf32>
    %288 = math.tanh %287 : vector<8x32xf32>
    %289 = vector.extract_strided_slice %286 {offsets = [0, 32], sizes = [8, 32], strides = [1, 1]} : vector<8x128xf32> to vector<8x32xf32>
    %290 = arith.mulf %289, %255 : vector<8x32xf32>
    %291 = vector.extract_strided_slice %286 {offsets = [0, 0], sizes = [8, 32], strides = [1, 1]} : vector<8x128xf32> to vector<8x32xf32>
    %292 = arith.mulf %291, %288 : vector<8x32xf32>
    %293 = arith.addf %290, %292 : vector<8x32xf32>
    %294 = vector.extract_strided_slice %286 {offsets = [0, 96], sizes = [8, 32], strides = [1, 1]} : vector<8x128xf32> to vector<8x32xf32>
    %295 = math.tanh %293 : vector<8x32xf32>
    %296 = arith.mulf %294, %295 : vector<8x32xf32>
    %c0_70 = arith.constant 0 : index
    %c192 = arith.constant 192 : index
    %297 = vector.load %arg11[%c0_70, %c192] : memref<8x256xf32, #tpu.memory_space<vmem>>, vector<8x32xf32>
    tpu.vector_store %arg11[%c0_70, %c192], %296 {strides = array<i32>} : memref<8x256xf32, #tpu.memory_space<vmem>>, vector<8x32xf32>,
    %cst_71 = arith.constant dense<0.000000e+00> : vector<8x128xf32>
    %298 = tpu.matmul %277, %1, %cst_71 {dimension_numbers = #tpu.dot_dimension_numbers<[1], [0], [0], [1], [0, 0, 1, 1], [], []>} : vector<8x32xf32>, vector<32x128xf32>, vector<8x128xf32> -> vector<8x128xf32>
    %299 = arith.addf %298, %12 : vector<8x128xf32>
    %cst_72 = arith.constant dense<0.000000e+00> : vector<8x128xf32>
    %300 = tpu.matmul %296, %3, %cst_72 {dimension_numbers = #tpu.dot_dimension_numbers<[1], [0], [0], [1], [0, 0, 1, 1], [], []>} : vector<8x32xf32>, vector<32x128xf32>, vector<8x128xf32> -> vector<8x128xf32>
    %301 = arith.addf %299, %300 : vector<8x128xf32>
    %302 = arith.negf %301 : vector<8x128xf32>
    %303 = math.exp %302 : vector<8x128xf32>
    %cst_73 = arith.constant 1.000000e+00 : f32
    %304 = vector.broadcast %cst_73 : f32 to vector<8x128xf32>
    %305 = arith.addf %304, %303 : vector<8x128xf32>
    %306 = arith.divf %304, %305 : vector<8x128xf32>
    %307 = vector.extract_strided_slice %301 {offsets = [0, 64], sizes = [8, 32], strides = [1, 1]} : vector<8x128xf32> to vector<8x32xf32>
    %308 = math.tanh %307 : vector<8x32xf32>
    %309 = vector.extract_strided_slice %306 {offsets = [0, 32], sizes = [8, 32], strides = [1, 1]} : vector<8x128xf32> to vector<8x32xf32>
    %310 = arith.mulf %309, %293 : vector<8x32xf32>
    %311 = vector.extract_strided_slice %306 {offsets = [0, 0], sizes = [8, 32], strides = [1, 1]} : vector<8x128xf32> to vector<8x32xf32>
    %312 = arith.mulf %311, %308 : vector<8x32xf32>
    %313 = arith.addf %310, %312 : vector<8x32xf32>
    %314 = vector.extract_strided_slice %306 {offsets = [0, 96], sizes = [8, 32], strides = [1, 1]} : vector<8x128xf32> to vector<8x32xf32>
    %315 = math.tanh %313 : vector<8x32xf32>
    %316 = arith.mulf %314, %315 : vector<8x32xf32>
    %c0_74 = arith.constant 0 : index
    %c224 = arith.constant 224 : index
    %317 = vector.load %arg11[%c0_74, %c224] : memref<8x256xf32, #tpu.memory_space<vmem>>, vector<8x32xf32>
    tpu.vector_store %arg11[%c0_74, %c224], %316 {strides = array<i32>} : memref<8x256xf32, #tpu.memory_space<vmem>>, vector<8x32xf32>,
    %c0_75 = arith.constant 0 : index
    %c0_76 = arith.constant 0 : index
    %318 = vector.load %arg11[%c0_75, %c0_76] : memref<8x256xf32, #tpu.memory_space<vmem>>, vector<8x256xf32>
    %c0_77 = arith.constant 0 : index
    %c0_78 = arith.constant 0 : index
    %319 = vector.load %arg7[%c0_77, %c0_78] : memref<256x128xf32, #tpu.memory_space<vmem>>, vector<256x128xf32>
    %cst_79 = arith.constant dense<0.000000e+00> : vector<8x128xf32>
    %320 = tpu.matmul %318, %319, %cst_79 {dimension_numbers = #tpu.dot_dimension_numbers<[1], [0], [0], [1], [0, 0, 1, 1], [], []>} : vector<8x256xf32>, vector<256x128xf32>, vector<8x128xf32> -> vector<8x128xf32>
    %c0_80 = arith.constant 0 : index
    %c0_81 = arith.constant 0 : index
    %321 = vector.load %arg8[%c0_80, %c0_81] : memref<1x128xf32, #tpu.memory_space<vmem>>, vector<1x128xf32>
    %322 = vector.broadcast %321 : vector<1x128xf32> to vector<8x128xf32>
    %323 = arith.addf %320, %322 : vector<8x128xf32>
    %324 = arith.negf %323 : vector<8x128xf32>
    %325 = math.exp %324 : vector<8x128xf32>
    %cst_82 = arith.constant 1.000000e+00 : f32
    %326 = vector.broadcast %cst_82 : f32 to vector<8x128xf32>
    %327 = arith.addf %326, %325 : vector<8x128xf32>
    %328 = arith.divf %326, %327 : vector<8x128xf32>
    %c0_83 = arith.constant 0 : index
    %c0_84 = arith.constant 0 : index
    %329 = vector.load %arg9[%c0_83, %c0_84] : memref<8x128xf32, #tpu.memory_space<vmem>>, vector<8x128xf32>
    tpu.vector_store %arg9[%c0_83, %c0_84], %328 {strides = array<i32>} : memref<8x128xf32, #tpu.memory_space<vmem>>, vector<8x128xf32>,
    return
  }
}

</mosaic_0001>

<llo_original>
// kernel: forward.1
$region0: #{forward.1}
  #allocation0 [shape = 'u32[]', space=smem, size = 0x4, offset = 0x4, fixed_abs, tag = 'smem constant byte address 0x4 - core index']
  #allocation1 [shape = 'u32[144,128]{1,0:T(1,128)}', space=vmem, size = 0x12000, scoped, tag = 'internal scratch']
  #allocation2 [shape = 'f32[64,128]{1,0:T(8,128)}', space=vmem, size = 0x8000, scoped, tag = 'scratch operand']
  #allocation3 [shape = 'f32[8,256]{1,0:T(8,128)}', space=vmem, size = 0x2000, scoped, tag = 'scratch operand']
  %s0 = inlined_call_operand.vmem [shape: f32[64,16], index: 0, kind: input, shape index: {}]
  %s1 = inlined_call_operand.vmem [shape: f32[16,128], index: 1, kind: input, shape index: {}]
  %s2 = inlined_call_operand.hbm [shape: f32[32,128], index: 2, kind: input, shape index: {}]
  %s3 = inlined_call_operand.vmem [shape: f32[1,128], index: 3, kind: input, shape index: {}]
  %s4 = inlined_call_operand.hbm [shape: f32[32,128], index: 4, kind: input, shape index: {}]
  %s5 = inlined_call_operand.vmem [shape: f32[32,128], index: 5, kind: input, shape index: {}]
  %s6 = inlined_call_operand.vmem [shape: f32[1,128], index: 6, kind: input, shape index: {}]
  %s7 = inlined_call_operand.vmem [shape: f32[256,128], index: 7, kind: input, shape index: {}]
  %s8 = inlined_call_operand.vmem [shape: f32[1,128], index: 8, kind: input, shape index: {}]
  %s9 = inlined_call_operand.vmem [shape: f32[8,128], index: 9, kind: output, shape index: {}]
  %s10 = sld [smem:[#allocation0]]
  $region54: #{forward.1} parent=0
    _
  %s12 = ssub.s32 1, %s10
  %s13 = scalar_select 0, %s12, %s10
  $region1: #{forward.1} parent=0
    #allocation4 [shape = 'u8[16384]{0}', space=vmem, size = 0x4000, scoped, tag = 'input window, operand 2, single buffered']
    #allocation5 [shape = 's32[1]{0}', space=sflag, size = 0x4, scoped, tag = 'scoped memory for forward.1']
    #allocation6 [shape = 'u8[16384]{0}', space=vmem, size = 0x4000, scoped, tag = 'input window, operand 4, single buffered']
    #allocation7 [shape = 's32[1]{0}', space=sflag, size = 0x4, scoped, tag = 'scoped memory for forward.1']
    %14 = vsyncpa [#allocation5], 0
    %15 = vsyncpa [#allocation7], 0
    // Predicated region
    $region2: #{forward.1} parent=1 // pred_check
      _
    $region3: #{forward.1} parent=1 // pred_check_branch
      %17 = sbr.rel (0) target = $region5
    $region4: #{forward.1} parent=1 // pred_region
      _
    $region5: #{forward.1} parent=1 // pred_fallthru
      _
    // Predicated region
    $region6: #{forward.1} parent=1 // pred_check
      _
    $region7: #{forward.1} parent=1 // pred_check_branch
      %19 = sbr.rel (0) target = $region9
    $region8: #{forward.1} parent=1 // pred_region
      _
    $region9: #{forward.1} parent=1 // pred_fallthru
      _
    // Predicated region
    $region10: #{forward.1} parent=1 // pred_check
      _
    $region11: #{forward.1} parent=1 // pred_check_branch
      %21 = sbr.rel (0) target = $region13
    $region12: #{forward.1} parent=1 // pred_region
      %s23 = ssub.s32 512, 512
      %24 = vsyncadd [#allocation5], %s23
      %s25 = sshll.u32 [#allocation4], 4
      %s26 = int_to_ptr.vmem [resolvable:$true] %s25
      %31 = dma.hbm_to_vmem [thread:$0]  %s2, 512, %s26, [#allocation5], 128, 128, 8
    $region13: #{forward.1} parent=1 // pred_fallthru
      _
    // Predicated region
    $region14: #{forward.1} parent=1 // pred_check
      _
    $region15: #{forward.1} parent=1 // pred_check_branch
      %33 = sbr.rel (0) target = $region17
    $region16: #{forward.1} parent=1 // pred_region
      _
    $region17: #{forward.1} parent=1 // pred_fallthru
      _
    // Predicated region
    $region18: #{forward.1} parent=1 // pred_check
      _
    $region19: #{forward.1} parent=1 // pred_check_branch
      %35 = sbr.rel (0) target = $region21
    $region20: #{forward.1} parent=1 // pred_region
      %s37 = ssub.s32 512, 512
      %38 = vsyncadd [#allocation7], %s37
      %s39 = sshll.u32 [#allocation6], 4
      %s40 = int_to_ptr.vmem [resolvable:$true] %s39
      %45 = dma.hbm_to_vmem [thread:$0]  %s4, 512, %s40, [#allocation7], 128, 128, 8
    $region21: #{forward.1} parent=1 // pred_fallthru
      _
    // Predicated region
    $region22: #{forward.1} parent=1 // pred_check
      _
    $region23: #{forward.1} parent=1 // pred_check_branch
      %47 = sbr.rel (0) target = $region25
    $region24: #{forward.1} parent=1 // pred_region
      _
    $region25: #{forward.1} parent=1 // pred_fallthru
      _
    // Predicated region
    $region26: #{forward.1} parent=1 // pred_check
      _
    $region27: #{forward.1} parent=1 // pred_check_branch
      %49 = sbr.rel (0) target = $region29
    $region28: #{forward.1} parent=1 // pred_region
      _
    $region29: #{forward.1} parent=1 // pred_fallthru
      _
    // Predicated region
    $region30: #{forward.1} parent=1 // pred_check
      _
    $region31: #{forward.1} parent=1 // pred_check_branch
      %51 = sbr.rel (0) target = $region33
    $region32: #{forward.1} parent=1 // pred_region
      _
    $region33: #{forward.1} parent=1 // pred_fallthru
      _
    // Predicated region
    $region34: #{forward.1} parent=1 // pred_check
      _
    $region35: #{forward.1} parent=1 // pred_check_branch
      %53 = sbr.rel (0) target = $region37
    $region36: #{forward.1} parent=1 // pred_region
      _
    $region37: #{forward.1} parent=1 // pred_fallthru
      _
    // Predicated region
    $region38: #{forward.1} parent=1 // pred_check
      _
    $region39: #{forward.1} parent=1 // pred_check_branch
      %55 = sbr.rel (0) target = $region41
    $region40: #{forward.1} parent=1 // pred_region
      %56 = dma.done [#allocation5], 512
    $region41: #{forward.1} parent=1 // pred_fallthru
      _
    // Predicated region
    $region42: #{forward.1} parent=1 // pred_check
      _
    $region43: #{forward.1} parent=1 // pred_check_branch
      %58 = sbr.rel (0) target = $region45
    $region44: #{forward.1} parent=1 // pred_region
      %59 = dma.done [#allocation7], 512
    $region45: #{forward.1} parent=1 // pred_fallthru
      _
    %v60 = vld [vmem:[%s1] sm:$0xff]
    %v61 = vld [vmem:[%s1 + $0x8] sm:$0xff]
    %v62 = vld [vmem:[#allocation6] sm:$0xff]
    %v63 = vld [vmem:[#allocation6 + $0x8] sm:$0xff]
    %v64 = vld [vmem:[#allocation6 + $0x10] sm:$0xff]
    %v65 = vld [vmem:[#allocation6 + $0x18] sm:$0xff]
    %v66 = vld [vmem:[#allocation4] sm:$0xff]
    %v67 = vld [vmem:[#allocation4 + $0x8] sm:$0xff]
    %v68 = vld [vmem:[#allocation4 + $0x10] sm:$0xff]
    %v69 = vld [vmem:[#allocation4 + $0x18] sm:$0xff]
    %v70 = vld [vmem:[%s5] sm:$0xff]
    %v71 = vld [vmem:[%s5 + $0x8] sm:$0xff]
    %v72 = vld [vmem:[%s5 + $0x10] sm:$0xff]
    %v73 = vld [vmem:[%s5 + $0x18] sm:$0xff]
    %v74 = vld [vmem:[%s3] sm:$0x1]
    %v75 = vld [vmem:[%s6] sm:$0x1]
    %v76 = vld [vmem:[%s0] sm:$0xff]
    %v77 = vld [vmem:[%s0 + $0x8] sm:$0xff]
    %v78 = vld [vmem:[%s0 + $0x10] sm:$0xff]
    %v79 = vld [vmem:[%s0 + $0x18] sm:$0xff]
    %v80 = vld [vmem:[%s0 + $0x20] sm:$0xff]
    %v81 = vld [vmem:[%s0 + $0x28] sm:$0xff]
    %v82 = vld [vmem:[%s0 + $0x30] sm:$0xff]
    %v83 = vld [vmem:[%s0 + $0x38] sm:$0xff]
    %v85 = vlaneseq
    %v86 = vshrl.u32 %v85, 7
    %v87 = vsub.s32 0, %v86
    %v88 = vrot.slane %v74, %v87
    %vm90 = vcmask 130048
    %v92 = vsel %vm90, %v76, 0
    %v95 = vsel %vm90, %v77, 0
    %v98 = vsel %vm90, %v78, 0
    %v101 = vsel %vm90, %v79, 0
    %v104 = vsel %vm90, %v80, 0
    %v107 = vsel %vm90, %v81, 0
    %v110 = vsel %vm90, %v82, 0
    %v113 = vsel %vm90, %v83, 0
    %115 = vmatprep.subr.mxu0 0.0
    %116 = vmatpush1.msra.mxu0 %v60
    %117 = vmatprep.subr.mxu0 0.0
    %118 = vmatpush1.msra.mxu0 %v61
    %119 = vmatprep.subr.mxu0 0.0
    %120 = vmatpush1.msra.mxu0 0.0
    %121 = vmatprep.subr.mxu0 0.0
    %122 = vmatpush1.msra.mxu0 0.0
    %123 = vmatprep.subr.mxu0 0.0
    %124 = vmatpush1.msra.mxu0 0.0
    %125 = vmatprep.subr.mxu0 0.0
    %126 = vmatpush1.msra.mxu0 0.0
    %127 = vmatprep.subr.mxu0 0.0
    %128 = vmatpush1.msra.mxu0 0.0
    %129 = vmatprep.subr.mxu0 0.0
    %130 = vmatpush1.msra.mxu0 0.0
    %131 = vmatprep.subr.mxu0 0.0
    %132 = vmatpush1.msra.mxu0 0.0
    %133 = vmatprep.subr.mxu0 0.0
    %134 = vmatpush1.msra.mxu0 0.0
    %135 = vmatprep.subr.mxu0 0.0
    %136 = vmatpush1.msra.mxu0 0.0
    %137 = vmatprep.subr.mxu0 0.0
    %138 = vmatpush1.msra.mxu0 0.0
    %139 = vmatprep.subr.mxu0 0.0
    %140 = vmatpush1.msra.mxu0 0.0
    %141 = vmatprep.subr.mxu0 0.0
    %142 = vmatpush1.msra.mxu0 0.0
    %143 = vmatprep.subr.mxu0 0.0
    %144 = vmatpush1.msra.mxu0 0.0
    %145 = vmatprep.subr.mxu0 0.0
    %146 = vmatpush1.msra.mxu0 0.0
    %147 = vmatprep.subr.mxu0 0.0
    %148 = vmatpush1.msra.mxu0 0.0
    %149 = vmatprep.subr.mxu0 0.0
    %150 = vmatpush1.msra.mxu0 0.0
    %151 = vmatprep.subr.mxu0 0.0
    %152 = vmatpush1.msra.mxu0 0.0
    %153 = vmatprep.subr.mxu0 0.0
    %154 = vmatpush1.msra.mxu0 0.0
    %155 = vmatprep.subr.mxu0 0.0
    %156 = vmatpush1.msra.mxu0 0.0
    %157 = vmatprep.subr.mxu0 0.0
    %158 = vmatpush1.msra.mxu0 0.0
    %159 = vmatprep.subr.mxu0 0.0
    %160 = vmatpush1.msra.mxu0 0.0
    %161 = vmatprep.subr.mxu0 0.0
    %162 = vmatpush1.msra.mxu0 0.0
    %163 = vmatprep.subr.mxu0 0.0
    %164 = vmatpush1.msra.mxu0 0.0
    %165 = vmatprep.subr.mxu0 0.0
    %166 = vmatpush1.msra.mxu0 0.0
    %167 = vmatprep.subr.mxu0 0.0
    %168 = vmatpush1.msra.mxu0 0.0
    %169 = vmatprep.subr.mxu0 0.0
    %170 = vmatpush1.msra.mxu0 0.0
    %171 = vmatprep.subr.mxu0 0.0
    %172 = vmatpush1.msra.mxu0 0.0
    %173 = vmatprep.subr.mxu0 0.0
    %174 = vmatpush1.msra.mxu0 0.0
    %175 = vmatprep.subr.mxu0 0.0
    %176 = vmatpush1.msra.mxu0 0.0
    %177 = vmatprep.subr.mxu0 0.0
    %178 = vmatpush1.msra.mxu0 0.0
    %179 = vmatprep.mubr.f32.mxu0 0.0
    %180 = vmatmul.mubr.f32.gmra.mrb[0].mxu0 %v92
    %v181 = vpop.f32.mrb[0].mxu0
    %v182 = vadd.f32 %v88, %v181
    %v183 = vpop.f32.mrb[0].mxu0
    %184 = vmatprep.mubr.f32.mxu0 0.0
    %185 = vmatmul.mubr.f32.gmra.mrb[0].mxu0 %v95
    %v186 = vpop.f32.mrb[0].mxu0
    %v187 = vadd.f32 %v88, %v186
    %v188 = vpop.f32.mrb[0].mxu0
    %189 = vmatprep.mubr.f32.mxu0 0.0
    %190 = vmatmul.mubr.f32.gmra.mrb[0].mxu0 %v98
    %v191 = vpop.f32.mrb[0].mxu0
    %v192 = vadd.f32 %v88, %v191
    %v193 = vpop.f32.mrb[0].mxu0
    %194 = vmatprep.mubr.f32.mxu0 0.0
    %195 = vmatmul.mubr.f32.gmra.mrb[0].mxu0 %v101
    %v196 = vpop.f32.mrb[0].mxu0
    %v197 = vadd.f32 %v88, %v196
    %v198 = vpop.f32.mrb[0].mxu0
    %199 = vmatprep.mubr.f32.mxu0 0.0
    %200 = vmatmul.mubr.f32.gmra.mrb[0].mxu0 %v104
    %v201 = vpop.f32.mrb[0].mxu0
    %v202 = vadd.f32 %v88, %v201
    %v203 = vpop.f32.mrb[0].mxu0
    %204 = vmatprep.mubr.f32.mxu0 0.0
    %205 = vmatmul.mubr.f32.gmra.mrb[0].mxu0 %v107
    %v206 = vpop.f32.mrb[0].mxu0
    %v207 = vadd.f32 %v88, %v206
    %v208 = vpop.f32.mrb[0].mxu0
    %209 = vmatprep.mubr.f32.mxu0 0.0
    %210 = vmatmul.mubr.f32.gmra.mrb[0].mxu0 %v110
    %v211 = vpop.f32.mrb[0].mxu0
    %v212 = vadd.f32 %v88, %v211
    %v213 = vpop.f32.mrb[0].mxu0
    %214 = vmatprep.mubr.f32.mxu0 0.0
    %215 = vmatmul.mubr.f32.gmra.mrb[0].mxu0 %v113
    %v216 = vpop.f32.mrb[0].mxu0
    %v217 = vadd.f32 %v88, %v216
    %v218 = vpop.f32.mrb[0].mxu0
    %219 = vdwg.mxu0
    %220 = vst [vmem:[#allocation2] sm:$0xff] %v182
    %221 = vst [vmem:[#allocation2 + $0x8] sm:$0xff] %v187
    %222 = vst [vmem:[#allocation2 + $0x10] sm:$0xff] %v192
    %223 = vst [vmem:[#allocation2 + $0x18] sm:$0xff] %v197
    %224 = vst [vmem:[#allocation2 + $0x20] sm:$0xff] %v202
    %225 = vst [vmem:[#allocation2 + $0x28] sm:$0xff] %v207
    %226 = vst [vmem:[#allocation2 + $0x30] sm:$0xff] %v212
    %227 = vst [vmem:[#allocation2 + $0x38] sm:$0xff] %v217
    %v229 = vlaneseq
    %v230 = vshrl.u32 %v229, 7
    %v231 = vsub.s32 0, %v230
    %v232 = vrot.slane %v75, %v231
    %v234 = vld [vmem:[#allocation2] sm:$0xff]
    %vm235 = vcmask 261120
    %v237 = vsel %vm235, 0.0, 0
    %239 = vmatprep.subr.mxu0 0.0
    %240 = vmatpush1.msra.mxu0 %v66
    %241 = vmatprep.subr.mxu0 0.0
    %242 = vmatpush1.msra.mxu0 %v67
    %243 = vmatprep.subr.mxu0 0.0
    %244 = vmatpush1.msra.mxu0 %v68
    %245 = vmatprep.subr.mxu0 0.0
    %246 = vmatpush1.msra.mxu0 %v69
    %247 = vmatprep.subr.mxu0 0.0
    %248 = vmatpush1.msra.mxu0 0.0
    %249 = vmatprep.subr.mxu0 0.0
    %250 = vmatpush1.msra.mxu0 0.0
    %251 = vmatprep.subr.mxu0 0.0
    %252 = vmatpush1.msra.mxu0 0.0
    %253 = vmatprep.subr.mxu0 0.0
    %254 = vmatpush1.msra.mxu0 0.0
    %255 = vmatprep.subr.mxu0 0.0
    %256 = vmatpush1.msra.mxu0 0.0
    %257 = vmatprep.subr.mxu0 0.0
    %258 = vmatpush1.msra.mxu0 0.0
    %259 = vmatprep.subr.mxu0 0.0
    %260 = vmatpush1.msra.mxu0 0.0
    %261 = vmatprep.subr.mxu0 0.0
    %262 = vmatpush1.msra.mxu0 0.0
    %263 = vmatprep.subr.mxu0 0.0
    %264 = vmatpush1.msra.mxu0 0.0
    %265 = vmatprep.subr.mxu0 0.0
    %266 = vmatpush1.msra.mxu0 0.0
    %267 = vmatprep.subr.mxu0 0.0
    %268 = vmatpush1.msra.mxu0 0.0
    %269 = vmatprep.subr.mxu0 0.0
    %270 = vmatpush1.msra.mxu0 0.0
    %271 = vmatprep.subr.mxu0 0.0
    %272 = vmatpush1.msra.mxu0 0.0
    %273 = vmatprep.subr.mxu0 0.0
    %274 = vmatpush1.msra.mxu0 0.0
    %275 = vmatprep.subr.mxu0 0.0
    %276 = vmatpush1.msra.mxu0 0.0
    %277 = vmatprep.subr.mxu0 0.0
    %278 = vmatpush1.msra.mxu0 0.0
    %279 = vmatprep.subr.mxu0 0.0
    %280 = vmatpush1.msra.mxu0 0.0
    %281 = vmatprep.subr.mxu0 0.0
    %282 = vmatpush1.msra.mxu0 0.0
    %283 = vmatprep.subr.mxu0 0.0
    %284 = vmatpush1.msra.mxu0 0.0
    %285 = vmatprep.subr.mxu0 0.0
    %286 = vmatpush1.msra.mxu0 0.0
    %287 = vmatprep.subr.mxu0 0.0
    %288 = vmatpush1.msra.mxu0 0.0
    %289 = vmatprep.subr.mxu0 0.0
    %290 = vmatpush1.msra.mxu0 0.0
    %291 = vmatprep.subr.mxu0 0.0
    %292 = vmatpush1.msra.mxu0 0.0
    %293 = vmatprep.subr.mxu0 0.0
    %294 = vmatpush1.msra.mxu0 0.0
    %295 = vmatprep.subr.mxu0 0.0
    %296 = vmatpush1.msra.mxu0 0.0
    %297 = vmatprep.subr.mxu0 0.0
    %298 = vmatpush1.msra.mxu0 0.0
    %299 = vmatprep.subr.mxu0 0.0
    %300 = vmatpush1.msra.mxu0 0.0
    %301 = vmatprep.subr.mxu0 0.0
    %302 = vmatpush1.msra.mxu0 0.0
    %303 = vmatprep.mubr.f32.mxu0 0.0
    %304 = vmatmul.mubr.f32.gmra.mrb[0].mxu0 %v237
    %v305 = vpop.f32.mrb[0].mxu0
    %v306 = vadd.f32 0.0, %v305
    %v307 = vpop.f32.mrb[0].mxu0
    %308 = vdwg.mxu0
    %v309 = vadd.f32 %v234, %v306
    %v310 = vxor.u32 %v309, 2147483648
    %v311 = vmul.f32 %v310, 1.442695
    %v312 = vpow.pop %v311
    %v313 = vadd.f32 %v312, 1.0
    %v314 = vrcp.pop %v313
    %v315 = vmul.f32 1.0, %v314
    %v316 = vtanh.pop %v309
    %v317 = vmul.f32 %v315, 0.0
    %319 = vrot.lane.b32.xlu0 %v316, 64
    %v320 = vpop.permute.xlu0 %319
    %v322 = vmul.f32 %v315, %v320
    %324 = vrot.lane.b32.xlu0 %v322, 32
    %v325 = vpop.permute.xlu0 %324
    %v327 = vadd.f32 %v317, %v325
    %v328 = vtanh.pop %v327
    %330 = vrot.lane.b32.xlu0 %v328, 64
    %v331 = vpop.permute.xlu0 %330
    %v333 = vmul.f32 %v315, %v331
    %v334 = vld [vmem:[#allocation2 + $0x8] sm:$0xff]
    %336 = vrot.lane.b32.xlu0 %v333, 32
    %v337 = vpop.permute.xlu0 %336
    %v338 = vsel %vm235, %v337, 0
    %340 = vmatprep.subr.mxu0 0.0
    %341 = vmatpush1.msra.mxu0 %v66
    %342 = vmatprep.subr.mxu0 0.0
    %343 = vmatpush1.msra.mxu0 %v67
    %344 = vmatprep.subr.mxu0 0.0
    %345 = vmatpush1.msra.mxu0 %v68
    %346 = vmatprep.subr.mxu0 0.0
    %347 = vmatpush1.msra.mxu0 %v69
    %348 = vmatprep.subr.mxu0 0.0
    %349 = vmatpush1.msra.mxu0 0.0
    %350 = vmatprep.subr.mxu0 0.0
    %351 = vmatpush1.msra.mxu0 0.0
    %352 = vmatprep.subr.mxu0 0.0
    %353 = vmatpush1.msra.mxu0 0.0
    %354 = vmatprep.subr.mxu0 0.0
    %355 = vmatpush1.msra.mxu0 0.0
    %356 = vmatprep.subr.mxu0 0.0
    %357 = vmatpush1.msra.mxu0 0.0
    %358 = vmatprep.subr.mxu0 0.0
    %359 = vmatpush1.msra.mxu0 0.0
    %360 = vmatprep.subr.mxu0 0.0
    %361 = vmatpush1.msra.mxu0 0.0
    %362 = vmatprep.subr.mxu0 0.0
    %363 = vmatpush1.msra.mxu0 0.0
    %364 = vmatprep.subr.mxu0 0.0
    %365 = vmatpush1.msra.mxu0 0.0
    %366 = vmatprep.subr.mxu0 0.0
    %367 = vmatpush1.msra.mxu0 0.0
    %368 = vmatprep.subr.mxu0 0.0
    %369 = vmatpush1.msra.mxu0 0.0
    %370 = vmatprep.subr.mxu0 0.0
    %371 = vmatpush1.msra.mxu0 0.0
    %372 = vmatprep.subr.mxu0 0.0
    %373 = vmatpush1.msra.mxu0 0.0
    %374 = vmatprep.subr.mxu0 0.0
    %375 = vmatpush1.msra.mxu0 0.0
    %376 = vmatprep.subr.mxu0 0.0
    %377 = vmatpush1.msra.mxu0 0.0
    %378 = vmatprep.subr.mxu0 0.0
    %379 = vmatpush1.msra.mxu0 0.0
    %380 = vmatprep.subr.mxu0 0.0
    %381 = vmatpush1.msra.mxu0 0.0
    %382 = vmatprep.subr.mxu0 0.0
    %383 = vmatpush1.msra.mxu0 0.0
    %384 = vmatprep.subr.mxu0 0.0
    %385 = vmatpush1.msra.mxu0 0.0
    %386 = vmatprep.subr.mxu0 0.0
    %387 = vmatpush1.msra.mxu0 0.0
    %388 = vmatprep.subr.mxu0 0.0
    %389 = vmatpush1.msra.mxu0 0.0
    %390 = vmatprep.subr.mxu0 0.0
    %391 = vmatpush1.msra.mxu0 0.0
    %392 = vmatprep.subr.mxu0 0.0
    %393 = vmatpush1.msra.mxu0 0.0
    %394 = vmatprep.subr.mxu0 0.0
    %395 = vmatpush1.msra.mxu0 0.0
    %396 = vmatprep.subr.mxu0 0.0
    %397 = vmatpush1.msra.mxu0 0.0
    %398 = vmatprep.subr.mxu0 0.0
    %399 = vmatpush1.msra.mxu0 0.0
    %400 = vmatprep.subr.mxu0 0.0
    %401 = vmatpush1.msra.mxu0 0.0
    %402 = vmatprep.subr.mxu0 0.0
    %403 = vmatpush1.msra.mxu0 0.0
    %404 = vmatprep.mubr.f32.mxu0 0.0
    %405 = vmatmul.mubr.f32.gmra.mrb[0].mxu0 %v338
    %v406 = vpop.f32.mrb[0].mxu0
    %v407 = vadd.f32 0.0, %v406
    %v408 = vpop.f32.mrb[0].mxu0
    %409 = vdwg.mxu0
    %v410 = vadd.f32 %v334, %v407
    %v411 = vxor.u32 %v410, 2147483648
    %v412 = vmul.f32 %v411, 1.442695
    %v413 = vpow.pop %v412
    %v414 = vadd.f32 %v413, 1.0
    %v415 = vrcp.pop %v414
    %v416 = vmul.f32 1.0, %v415
    %v417 = vtanh.pop %v410
    %v418 = vmul.f32 %v416, %v327
    %420 = vrot.lane.b32.xlu0 %v417, 64
    %v421 = vpop.permute.xlu0 %420
    %v423 = vmul.f32 %v416, %v421
    %425 = vrot.lane.b32.xlu0 %v423, 32
    %v426 = vpop.permute.xlu0 %425
    %v428 = vadd.f32 %v418, %v426
    %v429 = vtanh.pop %v428
    %431 = vrot.lane.b32.xlu0 %v429, 64
    %v432 = vpop.permute.xlu0 %431
    %v434 = vmul.f32 %v416, %v432
    %435 = vmatprep.subr.mxu0 0.0
    %436 = vmatpush1.msra.mxu0 %v62
    %437 = vmatprep.subr.mxu0 0.0
    %438 = vmatpush1.msra.mxu0 %v63
    %439 = vmatprep.subr.mxu0 0.0
    %440 = vmatpush1.msra.mxu0 %v64
    %441 = vmatprep.subr.mxu0 0.0
    %442 = vmatpush1.msra.mxu0 %v65
    %443 = vmatprep.subr.mxu0 0.0
    %444 = vmatpush1.msra.mxu0 0.0
    %445 = vmatprep.subr.mxu0 0.0
    %446 = vmatpush1.msra.mxu0 0.0
    %447 = vmatprep.subr.mxu0 0.0
    %448 = vmatpush1.msra.mxu0 0.0
    %449 = vmatprep.subr.mxu0 0.0
    %450 = vmatpush1.msra.mxu0 0.0
    %451 = vmatprep.subr.mxu0 0.0
    %452 = vmatpush1.msra.mxu0 0.0
    %453 = vmatprep.subr.mxu0 0.0
    %454 = vmatpush1.msra.mxu0 0.0
    %455 = vmatprep.subr.mxu0 0.0
    %456 = vmatpush1.msra.mxu0 0.0
    %457 = vmatprep.subr.mxu0 0.0
    %458 = vmatpush1.msra.mxu0 0.0
    %459 = vmatprep.subr.mxu0 0.0
    %460 = vmatpush1.msra.mxu0 0.0
    %461 = vmatprep.subr.mxu0 0.0
    %462 = vmatpush1.msra.mxu0 0.0
    %463 = vmatprep.subr.mxu0 0.0
    %464 = vmatpush1.msra.mxu0 0.0
    %465 = vmatprep.subr.mxu0 0.0
    %466 = vmatpush1.msra.mxu0 0.0
    %467 = vmatprep.subr.mxu0 0.0
    %468 = vmatpush1.msra.mxu0 0.0
    %469 = vmatprep.subr.mxu0 0.0
    %470 = vmatpush1.msra.mxu0 0.0
    %471 = vmatprep.subr.mxu0 0.0
    %472 = vmatpush1.msra.mxu0 0.0
    %473 = vmatprep.subr.mxu0 0.0
    %474 = vmatpush1.msra.mxu0 0.0
    %475 = vmatprep.subr.mxu0 0.0
    %476 = vmatpush1.msra.mxu0 0.0
    %477 = vmatprep.subr.mxu0 0.0
    %478 = vmatpush1.msra.mxu0 0.0
    %479 = vmatprep.subr.mxu0 0.0
    %480 = vmatpush1.msra.mxu0 0.0
    %481 = vmatprep.subr.mxu0 0.0
    %482 = vmatpush1.msra.mxu0 0.0
    %483 = vmatprep.subr.mxu0 0.0
    %484 = vmatpush1.msra.mxu0 0.0
    %485 = vmatprep.subr.mxu0 0.0
    %486 = vmatpush1.msra.mxu0 0.0
    %487 = vmatprep.subr.mxu0 0.0
    %488 = vmatpush1.msra.mxu0 0.0
    %489 = vmatprep.subr.mxu0 0.0
    %490 = vmatpush1.msra.mxu0 0.0
    %491 = vmatprep.subr.mxu0 0.0
    %492 = vmatpush1.msra.mxu0 0.0
    %493 = vmatprep.subr.mxu0 0.0
    %494 = vmatpush1.msra.mxu0 0.0
    %495 = vmatprep.subr.mxu0 0.0
    %496 = vmatpush1.msra.mxu0 0.0
    %497 = vmatprep.subr.mxu0 0.0
    %498 = vmatpush1.msra.mxu0 0.0
    %499 = vmatprep.mubr.f32.mxu0 0.0
    %500 = vmatmul.mubr.f32.gmra.mrb[0].mxu0 %v338
    %v501 = vpop.f32.mrb[0].mxu0
    %v502 = vadd.f32 %v232, %v501
    %v503 = vpop.f32.mrb[0].mxu0
    %504 = vdwg.mxu0
    %505 = vmatprep.subr.mxu0 0.0
    %506 = vmatpush1.msra.mxu0 %v70
    %507 = vmatprep.subr.mxu0 0.0
    %508 = vmatpush1.msra.mxu0 %v71
    %509 = vmatprep.subr.mxu0 0.0
    %510 = vmatpush1.msra.mxu0 %v72
    %511 = vmatprep.subr.mxu0 0.0
    %512 = vmatpush1.msra.mxu0 %v73
    %513 = vmatprep.subr.mxu0 0.0
    %514 = vmatpush1.msra.mxu0 0.0
    %515 = vmatprep.subr.mxu0 0.0
    %516 = vmatpush1.msra.mxu0 0.0
    %517 = vmatprep.subr.mxu0 0.0
    %518 = vmatpush1.msra.mxu0 0.0
    %519 = vmatprep.subr.mxu0 0.0
    %520 = vmatpush1.msra.mxu0 0.0
    %521 = vmatprep.subr.mxu0 0.0
    %522 = vmatpush1.msra.mxu0 0.0
    %523 = vmatprep.subr.mxu0 0.0
    %524 = vmatpush1.msra.mxu0 0.0
    %525 = vmatprep.subr.mxu0 0.0
    %526 = vmatpush1.msra.mxu0 0.0
    %527 = vmatprep.subr.mxu0 0.0
    %528 = vmatpush1.msra.mxu0 0.0
    %529 = vmatprep.subr.mxu0 0.0
    %530 = vmatpush1.msra.mxu0 0.0
    %531 = vmatprep.subr.mxu0 0.0
    %532 = vmatpush1.msra.mxu0 0.0
    %533 = vmatprep.subr.mxu0 0.0
    %534 = vmatpush1.msra.mxu0 0.0
    %535 = vmatprep.subr.mxu0 0.0
    %536 = vmatpush1.msra.mxu0 0.0
    %537 = vmatprep.subr.mxu0 0.0
    %538 = vmatpush1.msra.mxu0 0.0
    %539 = vmatprep.subr.mxu0 0.0
    %540 = vmatpush1.msra.mxu0 0.0
    %541 = vmatprep.subr.mxu0 0.0
    %542 = vmatpush1.msra.mxu0 0.0
    %543 = vmatprep.subr.mxu0 0.0
    %544 = vmatpush1.msra.mxu0 0.0
    %545 = vmatprep.subr.mxu0 0.0
    %546 = vmatpush1.msra.mxu0 0.0
    %547 = vmatprep.subr.mxu0 0.0
    %548 = vmatpush1.msra.mxu0 0.0
    %549 = vmatprep.subr.mxu0 0.0
    %550 = vmatpush1.msra.mxu0 0.0
    %551 = vmatprep.subr.mxu0 0.0
    %552 = vmatpush1.msra.mxu0 0.0
    %553 = vmatprep.subr.mxu0 0.0
    %554 = vmatpush1.msra.mxu0 0.0
    %555 = vmatprep.subr.mxu0 0.0
    %556 = vmatpush1.msra.mxu0 0.0
    %557 = vmatprep.subr.mxu0 0.0
    %558 = vmatpush1.msra.mxu0 0.0
    %559 = vmatprep.subr.mxu0 0.0
    %560 = vmatpush1.msra.mxu0 0.0
    %561 = vmatprep.subr.mxu0 0.0
    %562 = vmatpush1.msra.mxu0 0.0
    %563 = vmatprep.subr.mxu0 0.0
    %564 = vmatpush1.msra.mxu0 0.0
    %565 = vmatprep.subr.mxu0 0.0
    %566 = vmatpush1.msra.mxu0 0.0
    %567 = vmatprep.subr.mxu0 0.0
    %568 = vmatpush1.msra.mxu0 0.0
    %569 = vmatprep.mubr.f32.mxu0 0.0
    %570 = vmatmul.mubr.f32.gmra.mrb[0].mxu0 %v237
    %v571 = vpop.f32.mrb[0].mxu0
    %v572 = vadd.f32 0.0, %v571
    %v573 = vpop.f32.mrb[0].mxu0
    %574 = vdwg.mxu0
    %v575 = vadd.f32 %v502, %v572
    %v576 = vxor.u32 %v575, 2147483648
    %v577 = vmul.f32 %v576, 1.442695
    %v578 = vpow.pop %v577
    %v579 = vadd.f32 %v578, 1.0
    %v580 = vrcp.pop %v579
    %v581 = vmul.f32 1.0, %v580
    %v582 = vtanh.pop %v575
    %v583 = vmul.f32 %v581, 0.0
    %585 = vrot.lane.b32.xlu0 %v582, 64
    %v586 = vpop.permute.xlu0 %585
    %v588 = vmul.f32 %v581, %v586
    %590 = vrot.lane.b32.xlu0 %v588, 32
    %v591 = vpop.permute.xlu0 %590
    %v593 = vadd.f32 %v583, %v591
    %v594 = vtanh.pop %v593
    %596 = vrot.lane.b32.xlu0 %v594, 64
    %v597 = vpop.permute.xlu0 %596
    %v599 = vmul.f32 %v581, %v597
    %601 = vrot.lane.b32.xlu0 %v599, 32
    %v602 = vpop.permute.xlu0 %601
    %604 = vst.msk [vmem:[#allocation3] sm:$0xff] %vm235, %v602
    %v605 = vld [vmem:[#allocation2 + $0x10] sm:$0xff]
    %607 = vrot.lane.b32.xlu0 %v434, 32
    %v608 = vpop.permute.xlu0 %607
    %v609 = vsel %vm235, %v608, 0
    %611 = vmatprep.subr.mxu0 0.0
    %612 = vmatpush1.msra.mxu0 %v66
    %613 = vmatprep.subr.mxu0 0.0
    %614 = vmatpush1.msra.mxu0 %v67
    %615 = vmatprep.subr.mxu0 0.0
    %616 = vmatpush1.msra.mxu0 %v68
    %617 = vmatprep.subr.mxu0 0.0
    %618 = vmatpush1.msra.mxu0 %v69
    %619 = vmatprep.subr.mxu0 0.0
    %620 = vmatpush1.msra.mxu0 0.0
    %621 = vmatprep.subr.mxu0 0.0
    %622 = vmatpush1.msra.mxu0 0.0
    %623 = vmatprep.subr.mxu0 0.0
    %624 = vmatpush1.msra.mxu0 0.0
    %625 = vmatprep.subr.mxu0 0.0
    %626 = vmatpush1.msra.mxu0 0.0
    %627 = vmatprep.subr.mxu0 0.0
    %628 = vmatpush1.msra.mxu0 0.0
    %629 = vmatprep.subr.mxu0 0.0
    %630 = vmatpush1.msra.mxu0 0.0
    %631 = vmatprep.subr.mxu0 0.0
    %632 = vmatpush1.msra.mxu0 0.0
    %633 = vmatprep.subr.mxu0 0.0
    %634 = vmatpush1.msra.mxu0 0.0
    %635 = vmatprep.subr.mxu0 0.0
    %636 = vmatpush1.msra.mxu0 0.0
    %637 = vmatprep.subr.mxu0 0.0
    %638 = vmatpush1.msra.mxu0 0.0
    %639 = vmatprep.subr.mxu0 0.0
    %640 = vmatpush1.msra.mxu0 0.0
    %641 = vmatprep.subr.mxu0 0.0
    %642 = vmatpush1.msra.mxu0 0.0
    %643 = vmatprep.subr.mxu0 0.0
    %644 = vmatpush1.msra.mxu0 0.0
    %645 = vmatprep.subr.mxu0 0.0
    %646 = vmatpush1.msra.mxu0 0.0
    %647 = vmatprep.subr.mxu0 0.0
    %648 = vmatpush1.msra.mxu0 0.0
    %649 = vmatprep.subr.mxu0 0.0
    %650 = vmatpush1.msra.mxu0 0.0
    %651 = vmatprep.subr.mxu0 0.0
    %652 = vmatpush1.msra.mxu0 0.0
    %653 = vmatprep.subr.mxu0 0.0
    %654 = vmatpush1.msra.mxu0 0.0
    %655 = vmatprep.subr.mxu0 0.0
    %656 = vmatpush1.msra.mxu0 0.0
    %657 = vmatprep.subr.mxu0 0.0
    %658 = vmatpush1.msra.mxu0 0.0
    %659 = vmatprep.subr.mxu0 0.0
    %660 = vmatpush1.msra.mxu0 0.0
    %661 = vmatprep.subr.mxu0 0.0
    %662 = vmatpush1.msra.mxu0 0.0
    %663 = vmatprep.subr.mxu0 0.0
    %664 = vmatpush1.msra.mxu0 0.0
    %665 = vmatprep.subr.mxu0 0.0
    %666 = vmatpush1.msra.mxu0 0.0
    %667 = vmatprep.subr.mxu0 0.0
    %668 = vmatpush1.msra.mxu0 0.0
    %669 = vmatprep.subr.mxu0 0.0
    %670 = vmatpush1.msra.mxu0 0.0
    %671 = vmatprep.subr.mxu0 0.0
    %672 = vmatpush1.msra.mxu0 0.0
    %673 = vmatprep.subr.mxu0 0.0
    %674 = vmatpush1.msra.mxu0 0.0
    %675 = vmatprep.mubr.f32.mxu0 0.0
    %676 = vmatmul.mubr.f32.gmra.mrb[0].mxu0 %v609
    %v677 = vpop.f32.mrb[0].mxu0
    %v678 = vadd.f32 0.0, %v677
    %v679 = vpop.f32.mrb[0].mxu0
    %680 = vdwg.mxu0
    %v681 = vadd.f32 %v605, %v678
    %v682 = vxor.u32 %v681, 2147483648
    %v683 = vmul.f32 %v682, 1.442695
    %v684 = vpow.pop %v683
    %v685 = vadd.f32 %v684, 1.0
    %v686 = vrcp.pop %v685
    %v687 = vmul.f32 1.0, %v686
    %v688 = vtanh.pop %v681
    %v689 = vmul.f32 %v687, %v428
    %691 = vrot.lane.b32.xlu0 %v688, 64
    %v692 = vpop.permute.xlu0 %691
    %v694 = vmul.f32 %v687, %v692
    %696 = vrot.lane.b32.xlu0 %v694, 32
    %v697 = vpop.permute.xlu0 %696
    %v699 = vadd.f32 %v689, %v697
    %v700 = vtanh.pop %v699
    %702 = vrot.lane.b32.xlu0 %v700, 64
    %v703 = vpop.permute.xlu0 %702
    %v705 = vmul.f32 %v687, %v703
    %706 = vmatprep.subr.mxu0 0.0
    %707 = vmatpush1.msra.mxu0 %v62
    %708 = vmatprep.subr.mxu0 0.0
    %709 = vmatpush1.msra.mxu0 %v63
    %710 = vmatprep.subr.mxu0 0.0
    %711 = vmatpush1.msra.mxu0 %v64
    %712 = vmatprep.subr.mxu0 0.0
    %713 = vmatpush1.msra.mxu0 %v65
    %714 = vmatprep.subr.mxu0 0.0
    %715 = vmatpush1.msra.mxu0 0.0
    %716 = vmatprep.subr.mxu0 0.0
    %717 = vmatpush1.msra.mxu0 0.0
    %718 = vmatprep.subr.mxu0 0.0
    %719 = vmatpush1.msra.mxu0 0.0
    %720 = vmatprep.subr.mxu0 0.0
    %721 = vmatpush1.msra.mxu0 0.0
    %722 = vmatprep.subr.mxu0 0.0
    %723 = vmatpush1.msra.mxu0 0.0
    %724 = vmatprep.subr.mxu0 0.0
    %725 = vmatpush1.msra.mxu0 0.0
    %726 = vmatprep.subr.mxu0 0.0
    %727 = vmatpush1.msra.mxu0 0.0
    %728 = vmatprep.subr.mxu0 0.0
    %729 = vmatpush1.msra.mxu0 0.0
    %730 = vmatprep.subr.mxu0 0.0
    %731 = vmatpush1.msra.mxu0 0.0
    %732 = vmatprep.subr.mxu0 0.0
    %733 = vmatpush1.msra.mxu0 0.0
    %734 = vmatprep.subr.mxu0 0.0
    %735 = vmatpush1.msra.mxu0 0.0
    %736 = vmatprep.subr.mxu0 0.0
    %737 = vmatpush1.msra.mxu0 0.0
    %738 = vmatprep.subr.mxu0 0.0
    %739 = vmatpush1.msra.mxu0 0.0
    %740 = vmatprep.subr.mxu0 0.0
    %741 = vmatpush1.msra.mxu0 0.0
    %742 = vmatprep.subr.mxu0 0.0
    %743 = vmatpush1.msra.mxu0 0.0
    %744 = vmatprep.subr.mxu0 0.0
    %745 = vmatpush1.msra.mxu0 0.0
    %746 = vmatprep.subr.mxu0 0.0
    %747 = vmatpush1.msra.mxu0 0.0
    %748 = vmatprep.subr.mxu0 0.0
    %749 = vmatpush1.msra.mxu0 0.0
    %750 = vmatprep.subr.mxu0 0.0
    %751 = vmatpush1.msra.mxu0 0.0
    %752 = vmatprep.subr.mxu0 0.0
    %753 = vmatpush1.msra.mxu0 0.0
    %754 = vmatprep.subr.mxu0 0.0
    %755 = vmatpush1.msra.mxu0 0.0
    %756 = vmatprep.subr.mxu0 0.0
    %757 = vmatpush1.msra.mxu0 0.0
    %758 = vmatprep.subr.mxu0 0.0
    %759 = vmatpush1.msra.mxu0 0.0
    %760 = vmatprep.subr.mxu0 0.0
    %761 = vmatpush1.msra.mxu0 0.0
    %762 = vmatprep.subr.mxu0 0.0
    %763 = vmatpush1.msra.mxu0 0.0
    %764 = vmatprep.subr.mxu0 0.0
    %765 = vmatpush1.msra.mxu0 0.0
    %766 = vmatprep.subr.mxu0 0.0
    %767 = vmatpush1.msra.mxu0 0.0
    %768 = vmatprep.subr.mxu0 0.0
    %769 = vmatpush1.msra.mxu0 0.0
    %770 = vmatprep.mubr.f32.mxu0 0.0
    %771 = vmatmul.mubr.f32.gmra.mrb[0].mxu0 %v609
    %v772 = vpop.f32.mrb[0].mxu0
    %v773 = vadd.f32 %v232, %v772
    %v774 = vpop.f32.mrb[0].mxu0
    %775 = vdwg.mxu0
    %v776 = vsel %vm235, %v602, 0
    %778 = vmatprep.subr.mxu0 0.0
    %779 = vmatpush1.msra.mxu0 %v70
    %780 = vmatprep.subr.mxu0 0.0
    %781 = vmatpush1.msra.mxu0 %v71
    %782 = vmatprep.subr.mxu0 0.0
    %783 = vmatpush1.msra.mxu0 %v72
    %784 = vmatprep.subr.mxu0 0.0
    %785 = vmatpush1.msra.mxu0 %v73
    %786 = vmatprep.subr.mxu0 0.0
    %787 = vmatpush1.msra.mxu0 0.0
    %788 = vmatprep.subr.mxu0 0.0
    %789 = vmatpush1.msra.mxu0 0.0
    %790 = vmatprep.subr.mxu0 0.0
    %791 = vmatpush1.msra.mxu0 0.0
    %792 = vmatprep.subr.mxu0 0.0
    %793 = vmatpush1.msra.mxu0 0.0
    %794 = vmatprep.subr.mxu0 0.0
    %795 = vmatpush1.msra.mxu0 0.0
    %796 = vmatprep.subr.mxu0 0.0
    %797 = vmatpush1.msra.mxu0 0.0
    %798 = vmatprep.subr.mxu0 0.0
    %799 = vmatpush1.msra.mxu0 0.0
    %800 = vmatprep.subr.mxu0 0.0
    %801 = vmatpush1.msra.mxu0 0.0
    %802 = vmatprep.subr.mxu0 0.0
    %803 = vmatpush1.msra.mxu0 0.0
    %804 = vmatprep.subr.mxu0 0.0
    %805 = vmatpush1.msra.mxu0 0.0
    %806 = vmatprep.subr.mxu0 0.0
    %807 = vmatpush1.msra.mxu0 0.0
    %808 = vmatprep.subr.mxu0 0.0
    %809 = vmatpush1.msra.mxu0 0.0
    %810 = vmatprep.subr.mxu0 0.0
    %811 = vmatpush1.msra.mxu0 0.0
    %812 = vmatprep.subr.mxu0 0.0
    %813 = vmatpush1.msra.mxu0 0.0
    %814 = vmatprep.subr.mxu0 0.0
    %815 = vmatpush1.msra.mxu0 0.0
    %816 = vmatprep.subr.mxu0 0.0
    %817 = vmatpush1.msra.mxu0 0.0
    %818 = vmatprep.subr.mxu0 0.0
    %819 = vmatpush1.msra.mxu0 0.0
    %820 = vmatprep.subr.mxu0 0.0
    %821 = vmatpush1.msra.mxu0 0.0
    %822 = vmatprep.subr.mxu0 0.0
    %823 = vmatpush1.msra.mxu0 0.0
    %824 = vmatprep.subr.mxu0 0.0
    %825 = vmatpush1.msra.mxu0 0.0
    %826 = vmatprep.subr.mxu0 0.0
    %827 = vmatpush1.msra.mxu0 0.0
    %828 = vmatprep.subr.mxu0 0.0
    %829 = vmatpush1.msra.mxu0 0.0
    %830 = vmatprep.subr.mxu0 0.0
    %831 = vmatpush1.msra.mxu0 0.0
    %832 = vmatprep.subr.mxu0 0.0
    %833 = vmatpush1.msra.mxu0 0.0
    %834 = vmatprep.subr.mxu0 0.0
    %835 = vmatpush1.msra.mxu0 0.0
    %836 = vmatprep.subr.mxu0 0.0
    %837 = vmatpush1.msra.mxu0 0.0
    %838 = vmatprep.subr.mxu0 0.0
    %839 = vmatpush1.msra.mxu0 0.0
    %840 = vmatprep.subr.mxu0 0.0
    %841 = vmatpush1.msra.mxu0 0.0
    %842 = vmatprep.mubr.f32.mxu0 0.0
    %843 = vmatmul.mubr.f32.gmra.mrb[0].mxu0 %v776
    %v844 = vpop.f32.mrb[0].mxu0
    %v845 = vadd.f32 0.0, %v844
    %v846 = vpop.f32.mrb[0].mxu0
    %847 = vdwg.mxu0
    %v848 = vadd.f32 %v773, %v845
    %v849 = vxor.u32 %v848, 2147483648
    %v850 = vmul.f32 %v849, 1.442695
    %v851 = vpow.pop %v850
    %v852 = vadd.f32 %v851, 1.0
    %v853 = vrcp.pop %v852
    %v854 = vmul.f32 1.0, %v853
    %v855 = vtanh.pop %v848
    %v856 = vmul.f32 %v854, %v593
    %858 = vrot.lane.b32.xlu0 %v855, 64
    %v859 = vpop.permute.xlu0 %858
    %v861 = vmul.f32 %v854, %v859
    %863 = vrot.lane.b32.xlu0 %v861, 32
    %v864 = vpop.permute.xlu0 %863
    %v866 = vadd.f32 %v856, %v864
    %v867 = vtanh.pop %v866
    %869 = vrot.lane.b32.xlu0 %v867, 64
    %v870 = vpop.permute.xlu0 %869
    %v872 = vmul.f32 %v854, %v870
    %874 = vrot.lane.b32.xlu0 %v872, 64
    %v875 = vpop.permute.xlu0 %874
    %vm877 = vcmask 523520
    %878 = vst.msk [vmem:[#allocation3] sm:$0xff] %vm877, %v875
    %v879 = vld [vmem:[#allocation2 + $0x18] sm:$0xff]
    %881 = vrot.lane.b32.xlu0 %v705, 32
    %v882 = vpop.permute.xlu0 %881
    %v883 = vsel %vm235, %v882, 0
    %885 = vmatprep.subr.mxu0 0.0
    %886 = vmatpush1.msra.mxu0 %v66
    %887 = vmatprep.subr.mxu0 0.0
    %888 = vmatpush1.msra.mxu0 %v67
    %889 = vmatprep.subr.mxu0 0.0
    %890 = vmatpush1.msra.mxu0 %v68
    %891 = vmatprep.subr.mxu0 0.0
    %892 = vmatpush1.msra.mxu0 %v69
    %893 = vmatprep.subr.mxu0 0.0
    %894 = vmatpush1.msra.mxu0 0.0
    %895 = vmatprep.subr.mxu0 0.0
    %896 = vmatpush1.msra.mxu0 0.0
    %897 = vmatprep.subr.mxu0 0.0
    %898 = vmatpush1.msra.mxu0 0.0
    %899 = vmatprep.subr.mxu0 0.0
    %900 = vmatpush1.msra.mxu0 0.0
    %901 = vmatprep.subr.mxu0 0.0
    %902 = vmatpush1.msra.mxu0 0.0
    %903 = vmatprep.subr.mxu0 0.0
    %904 = vmatpush1.msra.mxu0 0.0
    %905 = vmatprep.subr.mxu0 0.0
    %906 = vmatpush1.msra.mxu0 0.0
    %907 = vmatprep.subr.mxu0 0.0
    %908 = vmatpush1.msra.mxu0 0.0
    %909 = vmatprep.subr.mxu0 0.0
    %910 = vmatpush1.msra.mxu0 0.0
    %911 = vmatprep.subr.mxu0 0.0
    %912 = vmatpush1.msra.mxu0 0.0
    %913 = vmatprep.subr.mxu0 0.0
    %914 = vmatpush1.msra.mxu0 0.0
    %915 = vmatprep.subr.mxu0 0.0
    %916 = vmatpush1.msra.mxu0 0.0
    %917 = vmatprep.subr.mxu0 0.0
    %918 = vmatpush1.msra.mxu0 0.0
    %919 = vmatprep.subr.mxu0 0.0
    %920 = vmatpush1.msra.mxu0 0.0
    %921 = vmatprep.subr.mxu0 0.0
    %922 = vmatpush1.msra.mxu0 0.0
    %923 = vmatprep.subr.mxu0 0.0
    %924 = vmatpush1.msra.mxu0 0.0
    %925 = vmatprep.subr.mxu0 0.0
    %926 = vmatpush1.msra.mxu0 0.0
    %927 = vmatprep.subr.mxu0 0.0
    %928 = vmatpush1.msra.mxu0 0.0
    %929 = vmatprep.subr.mxu0 0.0
    %930 = vmatpush1.msra.mxu0 0.0
    %931 = vmatprep.subr.mxu0 0.0
    %932 = vmatpush1.msra.mxu0 0.0
    %933 = vmatprep.subr.mxu0 0.0
    %934 = vmatpush1.msra.mxu0 0.0
    %935 = vmatprep.subr.mxu0 0.0
    %936 = vmatpush1.msra.mxu0 0.0
    %937 = vmatprep.subr.mxu0 0.0
    %938 = vmatpush1.msra.mxu0 0.0
    %939 = vmatprep.subr.mxu0 0.0
    %940 = vmatpush1.msra.mxu0 0.0
    %941 = vmatprep.subr.mxu0 0.0
    %942 = vmatpush1.msra.mxu0 0.0
    %943 = vmatprep.subr.mxu0 0.0
    %944 = vmatpush1.msra.mxu0 0.0
    %945 = vmatprep.subr.mxu0 0.0
    %946 = vmatpush1.msra.mxu0 0.0
    %947 = vmatprep.subr.mxu0 0.0
    %948 = vmatpush1.msra.mxu0 0.0
    %949 = vmatprep.mubr.f32.mxu0 0.0
    %950 = vmatmul.mubr.f32.gmra.mrb[0].mxu0 %v883
    %v951 = vpop.f32.mrb[0].mxu0
    %v952 = vadd.f32 0.0, %v951
    %v953 = vpop.f32.mrb[0].mxu0
    %954 = vdwg.mxu0
    %v955 = vadd.f32 %v879, %v952
    %v956 = vxor.u32 %v955, 2147483648
    %v957 = vmul.f32 %v956, 1.442695
    %v958 = vpow.pop %v957
    %v959 = vadd.f32 %v958, 1.0
    %v960 = vrcp.pop %v959
    %v961 = vmul.f32 1.0, %v960
    %v962 = vtanh.pop %v955
    %v963 = vmul.f32 %v961, %v699
    %965 = vrot.lane.b32.xlu0 %v962, 64
    %v966 = vpop.permute.xlu0 %965
    %v968 = vmul.f32 %v961, %v966
    %970 = vrot.lane.b32.xlu0 %v968, 32
    %v971 = vpop.permute.xlu0 %970
    %v973 = vadd.f32 %v963, %v971
    %v974 = vtanh.pop %v973
    %976 = vrot.lane.b32.xlu0 %v974, 64
    %v977 = vpop.permute.xlu0 %976
    %v979 = vmul.f32 %v961, %v977
    %980 = vmatprep.subr.mxu0 0.0
    %981 = vmatpush1.msra.mxu0 %v62
    %982 = vmatprep.subr.mxu0 0.0
    %983 = vmatpush1.msra.mxu0 %v63
    %984 = vmatprep.subr.mxu0 0.0
    %985 = vmatpush1.msra.mxu0 %v64
    %986 = vmatprep.subr.mxu0 0.0
    %987 = vmatpush1.msra.mxu0 %v65
    %988 = vmatprep.subr.mxu0 0.0
    %989 = vmatpush1.msra.mxu0 0.0
    %990 = vmatprep.subr.mxu0 0.0
    %991 = vmatpush1.msra.mxu0 0.0
    %992 = vmatprep.subr.mxu0 0.0
    %993 = vmatpush1.msra.mxu0 0.0
    %994 = vmatprep.subr.mxu0 0.0
    %995 = vmatpush1.msra.mxu0 0.0
    %996 = vmatprep.subr.mxu0 0.0
    %997 = vmatpush1.msra.mxu0 0.0
    %998 = vmatprep.subr.mxu0 0.0
    %999 = vmatpush1.msra.mxu0 0.0
    %1000 = vmatprep.subr.mxu0 0.0
    %1001 = vmatpush1.msra.mxu0 0.0
    %1002 = vmatprep.subr.mxu0 0.0
    %1003 = vmatpush1.msra.mxu0 0.0
    %1004 = vmatprep.subr.mxu0 0.0
    %1005 = vmatpush1.msra.mxu0 0.0
    %1006 = vmatprep.subr.mxu0 0.0
    %1007 = vmatpush1.msra.mxu0 0.0
    %1008 = vmatprep.subr.mxu0 0.0
    %1009 = vmatpush1.msra.mxu0 0.0
    %1010 = vmatprep.subr.mxu0 0.0
    %1011 = vmatpush1.msra.mxu0 0.0
    %1012 = vmatprep.subr.mxu0 0.0
    %1013 = vmatpush1.msra.mxu0 0.0
    %1014 = vmatprep.subr.mxu0 0.0
    %1015 = vmatpush1.msra.mxu0 0.0
    %1016 = vmatprep.subr.mxu0 0.0
    %1017 = vmatpush1.msra.mxu0 0.0
    %1018 = vmatprep.subr.mxu0 0.0
    %1019 = vmatpush1.msra.mxu0 0.0
    %1020 = vmatprep.subr.mxu0 0.0
    %1021 = vmatpush1.msra.mxu0 0.0
    %1022 = vmatprep.subr.mxu0 0.0
    %1023 = vmatpush1.msra.mxu0 0.0
    %1024 = vmatprep.subr.mxu0 0.0
    %1025 = vmatpush1.msra.mxu0 0.0
    %1026 = vmatprep.subr.mxu0 0.0
    %1027 = vmatpush1.msra.mxu0 0.0
    %1028 = vmatprep.subr.mxu0 0.0
    %1029 = vmatpush1.msra.mxu0 0.0
    %1030 = vmatprep.subr.mxu0 0.0
    %1031 = vmatpush1.msra.mxu0 0.0
    %1032 = vmatprep.subr.mxu0 0.0
    %1033 = vmatpush1.msra.mxu0 0.0
    %1034 = vmatprep.subr.mxu0 0.0
    %1035 = vmatpush1.msra.mxu0 0.0
    %1036 = vmatprep.subr.mxu0 0.0
    %1037 = vmatpush1.msra.mxu0 0.0
    %1038 = vmatprep.subr.mxu0 0.0
    %1039 = vmatpush1.msra.mxu0 0.0
    %1040 = vmatprep.subr.mxu0 0.0
    %1041 = vmatpush1.msra.mxu0 0.0
    %1042 = vmatprep.subr.mxu0 0.0
    %1043 = vmatpush1.msra.mxu0 0.0
    %1044 = vmatprep.mubr.f32.mxu0 0.0
    %1045 = vmatmul.mubr.f32.gmra.mrb[0].mxu0 %v883
    %v1046 = vpop.f32.mrb[0].mxu0
    %v1047 = vadd.f32 %v232, %v1046
    %v1048 = vpop.f32.mrb[0].mxu0
    %1049 = vdwg.mxu0
    %1050 = vrot.lane.b32.xlu0 %v872, 32
    %v1051 = vpop.permute.xlu0 %1050
    %v1052 = vsel %vm235, %v1051, 0
    %1054 = vmatprep.subr.mxu0 0.0
    %1055 = vmatpush1.msra.mxu0 %v70
    %1056 = vmatprep.subr.mxu0 0.0
    %1057 = vmatpush1.msra.mxu0 %v71
    %1058 = vmatprep.subr.mxu0 0.0
    %1059 = vmatpush1.msra.mxu0 %v72
    %1060 = vmatprep.subr.mxu0 0.0
    %1061 = vmatpush1.msra.mxu0 %v73
    %1062 = vmatprep.subr.mxu0 0.0
    %1063 = vmatpush1.msra.mxu0 0.0
    %1064 = vmatprep.subr.mxu0 0.0
    %1065 = vmatpush1.msra.mxu0 0.0
    %1066 = vmatprep.subr.mxu0 0.0
    %1067 = vmatpush1.msra.mxu0 0.0
    %1068 = vmatprep.subr.mxu0 0.0
    %1069 = vmatpush1.msra.mxu0 0.0
    %1070 = vmatprep.subr.mxu0 0.0
    %1071 = vmatpush1.msra.mxu0 0.0
    %1072 = vmatprep.subr.mxu0 0.0
    %1073 = vmatpush1.msra.mxu0 0.0
    %1074 = vmatprep.subr.mxu0 0.0
    %1075 = vmatpush1.msra.mxu0 0.0
    %1076 = vmatprep.subr.mxu0 0.0
    %1077 = vmatpush1.msra.mxu0 0.0
    %1078 = vmatprep.subr.mxu0 0.0
    %1079 = vmatpush1.msra.mxu0 0.0
    %1080 = vmatprep.subr.mxu0 0.0
    %1081 = vmatpush1.msra.mxu0 0.0
    %1082 = vmatprep.subr.mxu0 0.0
    %1083 = vmatpush1.msra.mxu0 0.0
    %1084 = vmatprep.subr.mxu0 0.0
    %1085 = vmatpush1.msra.mxu0 0.0
    %1086 = vmatprep.subr.mxu0 0.0
    %1087 = vmatpush1.msra.mxu0 0.0
    %1088 = vmatprep.subr.mxu0 0.0
    %1089 = vmatpush1.msra.mxu0 0.0
    %1090 = vmatprep.subr.mxu0 0.0
    %1091 = vmatpush1.msra.mxu0 0.0
    %1092 = vmatprep.subr.mxu0 0.0
    %1093 = vmatpush1.msra.mxu0 0.0
    %1094 = vmatprep.subr.mxu0 0.0
    %1095 = vmatpush1.msra.mxu0 0.0
    %1096 = vmatprep.subr.mxu0 0.0
    %1097 = vmatpush1.msra.mxu0 0.0
    %1098 = vmatprep.subr.mxu0 0.0
    %1099 = vmatpush1.msra.mxu0 0.0
    %1100 = vmatprep.subr.mxu0 0.0
    %1101 = vmatpush1.msra.mxu0 0.0
    %1102 = vmatprep.subr.mxu0 0.0
    %1103 = vmatpush1.msra.mxu0 0.0
    %1104 = vmatprep.subr.mxu0 0.0
    %1105 = vmatpush1.msra.mxu0 0.0
    %1106 = vmatprep.subr.mxu0 0.0
    %1107 = vmatpush1.msra.mxu0 0.0
    %1108 = vmatprep.subr.mxu0 0.0
    %1109 = vmatpush1.msra.mxu0 0.0
    %1110 = vmatprep.subr.mxu0 0.0
    %1111 = vmatpush1.msra.mxu0 0.0
    %1112 = vmatprep.subr.mxu0 0.0
    %1113 = vmatpush1.msra.mxu0 0.0
    %1114 = vmatprep.subr.mxu0 0.0
    %1115 = vmatpush1.msra.mxu0 0.0
    %1116 = vmatprep.subr.mxu0 0.0
    %1117 = vmatpush1.msra.mxu0 0.0
    %1118 = vmatprep.mubr.f32.mxu0 0.0
    %1119 = vmatmul.mubr.f32.gmra.mrb[0].mxu0 %v1052
    %v1120 = vpop.f32.mrb[0].mxu0
    %v1121 = vadd.f32 0.0, %v1120
    %v1122 = vpop.f32.mrb[0].mxu0
    %1123 = vdwg.mxu0
    %v1124 = vadd.f32 %v1047, %v1121
    %v1125 = vxor.u32 %v1124, 2147483648
    %v1126 = vmul.f32 %v1125, 1.442695
    %v1127 = vpow.pop %v1126
    %v1128 = vadd.f32 %v1127, 1.0
    %v1129 = vrcp.pop %v1128
    %v1130 = vmul.f32 1.0, %v1129
    %v1131 = vtanh.pop %v1124
    %v1132 = vmul.f32 %v1130, %v866
    %1134 = vrot.lane.b32.xlu0 %v1131, 64
    %v1135 = vpop.permute.xlu0 %1134
    %v1137 = vmul.f32 %v1130, %v1135
    %1139 = vrot.lane.b32.xlu0 %v1137, 32
    %v1140 = vpop.permute.xlu0 %1139
    %v1142 = vadd.f32 %v1132, %v1140
    %v1143 = vtanh.pop %v1142
    %1145 = vrot.lane.b32.xlu0 %v1143, 64
    %v1146 = vpop.permute.xlu0 %1145
    %v1148 = vmul.f32 %v1130, %v1146
    %1150 = vrot.lane.b32.xlu0 %v1148, 96
    %v1151 = vpop.permute.xlu0 %1150
    %vm1153 = vcmask 785920
    %1154 = vst.msk [vmem:[#allocation3] sm:$0xff] %vm1153, %v1151
    %v1155 = vld [vmem:[#allocation2 + $0x20] sm:$0xff]
    %1157 = vrot.lane.b32.xlu0 %v979, 32
    %v1158 = vpop.permute.xlu0 %1157
    %v1159 = vsel %vm235, %v1158, 0
    %1161 = vmatprep.subr.mxu0 0.0
    %1162 = vmatpush1.msra.mxu0 %v66
    %1163 = vmatprep.subr.mxu0 0.0
    %1164 = vmatpush1.msra.mxu0 %v67
    %1165 = vmatprep.subr.mxu0 0.0
    %1166 = vmatpush1.msra.mxu0 %v68
    %1167 = vmatprep.subr.mxu0 0.0
    %1168 = vmatpush1.msra.mxu0 %v69
    %1169 = vmatprep.subr.mxu0 0.0
    %1170 = vmatpush1.msra.mxu0 0.0
    %1171 = vmatprep.subr.mxu0 0.0
    %1172 = vmatpush1.msra.mxu0 0.0
    %1173 = vmatprep.subr.mxu0 0.0
    %1174 = vmatpush1.msra.mxu0 0.0
    %1175 = vmatprep.subr.mxu0 0.0
    %1176 = vmatpush1.msra.mxu0 0.0
    %1177 = vmatprep.subr.mxu0 0.0
    %1178 = vmatpush1.msra.mxu0 0.0
    %1179 = vmatprep.subr.mxu0 0.0
    %1180 = vmatpush1.msra.mxu0 0.0
    %1181 = vmatprep.subr.mxu0 0.0
    %1182 = vmatpush1.msra.mxu0 0.0
    %1183 = vmatprep.subr.mxu0 0.0
    %1184 = vmatpush1.msra.mxu0 0.0
    %1185 = vmatprep.subr.mxu0 0.0
    %1186 = vmatpush1.msra.mxu0 0.0
    %1187 = vmatprep.subr.mxu0 0.0
    %1188 = vmatpush1.msra.mxu0 0.0
    %1189 = vmatprep.subr.mxu0 0.0
    %1190 = vmatpush1.msra.mxu0 0.0
    %1191 = vmatprep.subr.mxu0 0.0
    %1192 = vmatpush1.msra.mxu0 0.0
    %1193 = vmatprep.subr.mxu0 0.0
    %1194 = vmatpush1.msra.mxu0 0.0
    %1195 = vmatprep.subr.mxu0 0.0
    %1196 = vmatpush1.msra.mxu0 0.0
    %1197 = vmatprep.subr.mxu0 0.0
    %1198 = vmatpush1.msra.mxu0 0.0
    %1199 = vmatprep.subr.mxu0 0.0
    %1200 = vmatpush1.msra.mxu0 0.0
    %1201 = vmatprep.subr.mxu0 0.0
    %1202 = vmatpush1.msra.mxu0 0.0
    %1203 = vmatprep.subr.mxu0 0.0
    %1204 = vmatpush1.msra.mxu0 0.0
    %1205 = vmatprep.subr.mxu0 0.0
    %1206 = vmatpush1.msra.mxu0 0.0
    %1207 = vmatprep.subr.mxu0 0.0
    %1208 = vmatpush1.msra.mxu0 0.0
    %1209 = vmatprep.subr.mxu0 0.0
    %1210 = vmatpush1.msra.mxu0 0.0
    %1211 = vmatprep.subr.mxu0 0.0
    %1212 = vmatpush1.msra.mxu0 0.0
    %1213 = vmatprep.subr.mxu0 0.0
    %1214 = vmatpush1.msra.mxu0 0.0
    %1215 = vmatprep.subr.mxu0 0.0
    %1216 = vmatpush1.msra.mxu0 0.0
    %1217 = vmatprep.subr.mxu0 0.0
    %1218 = vmatpush1.msra.mxu0 0.0
    %1219 = vmatprep.subr.mxu0 0.0
    %1220 = vmatpush1.msra.mxu0 0.0
    %1221 = vmatprep.subr.mxu0 0.0
    %1222 = vmatpush1.msra.mxu0 0.0
    %1223 = vmatprep.subr.mxu0 0.0
    %1224 = vmatpush1.msra.mxu0 0.0
    %1225 = vmatprep.mubr.f32.mxu0 0.0
    %1226 = vmatmul.mubr.f32.gmra.mrb[0].mxu0 %v1159
    %v1227 = vpop.f32.mrb[0].mxu0
    %v1228 = vadd.f32 0.0, %v1227
    %v1229 = vpop.f32.mrb[0].mxu0
    %1230 = vdwg.mxu0
    %v1231 = vadd.f32 %v1155, %v1228
    %v1232 = vxor.u32 %v1231, 2147483648
    %v1233 = vmul.f32 %v1232, 1.442695
    %v1234 = vpow.pop %v1233
    %v1235 = vadd.f32 %v1234, 1.0
    %v1236 = vrcp.pop %v1235
    %v1237 = vmul.f32 1.0, %v1236
    %v1238 = vtanh.pop %v1231
    %v1239 = vmul.f32 %v1237, %v973
    %1241 = vrot.lane.b32.xlu0 %v1238, 64
    %v1242 = vpop.permute.xlu0 %1241
    %v1244 = vmul.f32 %v1237, %v1242
    %1246 = vrot.lane.b32.xlu0 %v1244, 32
    %v1247 = vpop.permute.xlu0 %1246
    %v1249 = vadd.f32 %v1239, %v1247
    %v1250 = vtanh.pop %v1249
    %1252 = vrot.lane.b32.xlu0 %v1250, 64
    %v1253 = vpop.permute.xlu0 %1252
    %v1255 = vmul.f32 %v1237, %v1253
    %1256 = vmatprep.subr.mxu0 0.0
    %1257 = vmatpush1.msra.mxu0 %v62
    %1258 = vmatprep.subr.mxu0 0.0
    %1259 = vmatpush1.msra.mxu0 %v63
    %1260 = vmatprep.subr.mxu0 0.0
    %1261 = vmatpush1.msra.mxu0 %v64
    %1262 = vmatprep.subr.mxu0 0.0
    %1263 = vmatpush1.msra.mxu0 %v65
    %1264 = vmatprep.subr.mxu0 0.0
    %1265 = vmatpush1.msra.mxu0 0.0
    %1266 = vmatprep.subr.mxu0 0.0
    %1267 = vmatpush1.msra.mxu0 0.0
    %1268 = vmatprep.subr.mxu0 0.0
    %1269 = vmatpush1.msra.mxu0 0.0
    %1270 = vmatprep.subr.mxu0 0.0
    %1271 = vmatpush1.msra.mxu0 0.0
    %1272 = vmatprep.subr.mxu0 0.0
    %1273 = vmatpush1.msra.mxu0 0.0
    %1274 = vmatprep.subr.mxu0 0.0
    %1275 = vmatpush1.msra.mxu0 0.0
    %1276 = vmatprep.subr.mxu0 0.0
    %1277 = vmatpush1.msra.mxu0 0.0
    %1278 = vmatprep.subr.mxu0 0.0
    %1279 = vmatpush1.msra.mxu0 0.0
    %1280 = vmatprep.subr.mxu0 0.0
    %1281 = vmatpush1.msra.mxu0 0.0
    %1282 = vmatprep.subr.mxu0 0.0
    %1283 = vmatpush1.msra.mxu0 0.0
    %1284 = vmatprep.subr.mxu0 0.0
    %1285 = vmatpush1.msra.mxu0 0.0
    %1286 = vmatprep.subr.mxu0 0.0
    %1287 = vmatpush1.msra.mxu0 0.0
    %1288 = vmatprep.subr.mxu0 0.0
    %1289 = vmatpush1.msra.mxu0 0.0
    %1290 = vmatprep.subr.mxu0 0.0
    %1291 = vmatpush1.msra.mxu0 0.0
    %1292 = vmatprep.subr.mxu0 0.0
    %1293 = vmatpush1.msra.mxu0 0.0
    %1294 = vmatprep.subr.mxu0 0.0
    %1295 = vmatpush1.msra.mxu0 0.0
    %1296 = vmatprep.subr.mxu0 0.0
    %1297 = vmatpush1.msra.mxu0 0.0
    %1298 = vmatprep.subr.mxu0 0.0
    %1299 = vmatpush1.msra.mxu0 0.0
    %1300 = vmatprep.subr.mxu0 0.0
    %1301 = vmatpush1.msra.mxu0 0.0
    %1302 = vmatprep.subr.mxu0 0.0
    %1303 = vmatpush1.msra.mxu0 0.0
    %1304 = vmatprep.subr.mxu0 0.0
    %1305 = vmatpush1.msra.mxu0 0.0
    %1306 = vmatprep.subr.mxu0 0.0
    %1307 = vmatpush1.msra.mxu0 0.0
    %1308 = vmatprep.subr.mxu0 0.0
    %1309 = vmatpush1.msra.mxu0 0.0
    %1310 = vmatprep.subr.mxu0 0.0
    %1311 = vmatpush1.msra.mxu0 0.0
    %1312 = vmatprep.subr.mxu0 0.0
    %1313 = vmatpush1.msra.mxu0 0.0
    %1314 = vmatprep.subr.mxu0 0.0
    %1315 = vmatpush1.msra.mxu0 0.0
    %1316 = vmatprep.subr.mxu0 0.0
    %1317 = vmatpush1.msra.mxu0 0.0
    %1318 = vmatprep.subr.mxu0 0.0
    %1319 = vmatpush1.msra.mxu0 0.0
    %1320 = vmatprep.mubr.f32.mxu0 0.0
    %1321 = vmatmul.mubr.f32.gmra.mrb[0].mxu0 %v1159
    %v1322 = vpop.f32.mrb[0].mxu0
    %v1323 = vadd.f32 %v232, %v1322
    %v1324 = vpop.f32.mrb[0].mxu0
    %1325 = vdwg.mxu0
    %1326 = vrot.lane.b32.xlu0 %v1148, 32
    %v1327 = vpop.permute.xlu0 %1326
    %v1328 = vsel %vm235, %v1327, 0
    %1330 = vmatprep.subr.mxu0 0.0
    %1331 = vmatpush1.msra.mxu0 %v70
    %1332 = vmatprep.subr.mxu0 0.0
    %1333 = vmatpush1.msra.mxu0 %v71
    %1334 = vmatprep.subr.mxu0 0.0
    %1335 = vmatpush1.msra.mxu0 %v72
    %1336 = vmatprep.subr.mxu0 0.0
    %1337 = vmatpush1.msra.mxu0 %v73
    %1338 = vmatprep.subr.mxu0 0.0
    %1339 = vmatpush1.msra.mxu0 0.0
    %1340 = vmatprep.subr.mxu0 0.0
    %1341 = vmatpush1.msra.mxu0 0.0
    %1342 = vmatprep.subr.mxu0 0.0
    %1343 = vmatpush1.msra.mxu0 0.0
    %1344 = vmatprep.subr.mxu0 0.0
    %1345 = vmatpush1.msra.mxu0 0.0
    %1346 = vmatprep.subr.mxu0 0.0
    %1347 = vmatpush1.msra.mxu0 0.0
    %1348 = vmatprep.subr.mxu0 0.0
    %1349 = vmatpush1.msra.mxu0 0.0
    %1350 = vmatprep.subr.mxu0 0.0
    %1351 = vmatpush1.msra.mxu0 0.0
    %1352 = vmatprep.subr.mxu0 0.0
    %1353 = vmatpush1.msra.mxu0 0.0
    %1354 = vmatprep.subr.mxu0 0.0
    %1355 = vmatpush1.msra.mxu0 0.0
    %1356 = vmatprep.subr.mxu0 0.0
    %1357 = vmatpush1.msra.mxu0 0.0
    %1358 = vmatprep.subr.mxu0 0.0
    %1359 = vmatpush1.msra.mxu0 0.0
    %1360 = vmatprep.subr.mxu0 0.0
    %1361 = vmatpush1.msra.mxu0 0.0
    %1362 = vmatprep.subr.mxu0 0.0
    %1363 = vmatpush1.msra.mxu0 0.0
    %1364 = vmatprep.subr.mxu0 0.0
    %1365 = vmatpush1.msra.mxu0 0.0
    %1366 = vmatprep.subr.mxu0 0.0
    %1367 = vmatpush1.msra.mxu0 0.0
    %1368 = vmatprep.subr.mxu0 0.0
    %1369 = vmatpush1.msra.mxu0 0.0
    %1370 = vmatprep.subr.mxu0 0.0
    %1371 = vmatpush1.msra.mxu0 0.0
    %1372 = vmatprep.subr.mxu0 0.0
    %1373 = vmatpush1.msra.mxu0 0.0
    %1374 = vmatprep.subr.mxu0 0.0
    %1375 = vmatpush1.msra.mxu0 0.0
    %1376 = vmatprep.subr.mxu0 0.0
    %1377 = vmatpush1.msra.mxu0 0.0
    %1378 = vmatprep.subr.mxu0 0.0
    %1379 = vmatpush1.msra.mxu0 0.0
    %1380 = vmatprep.subr.mxu0 0.0
    %1381 = vmatpush1.msra.mxu0 0.0
    %1382 = vmatprep.subr.mxu0 0.0
    %1383 = vmatpush1.msra.mxu0 0.0
    %1384 = vmatprep.subr.mxu0 0.0
    %1385 = vmatpush1.msra.mxu0 0.0
    %1386 = vmatprep.subr.mxu0 0.0
    %1387 = vmatpush1.msra.mxu0 0.0
    %1388 = vmatprep.subr.mxu0 0.0
    %1389 = vmatpush1.msra.mxu0 0.0
    %1390 = vmatprep.subr.mxu0 0.0
    %1391 = vmatpush1.msra.mxu0 0.0
    %1392 = vmatprep.subr.mxu0 0.0
    %1393 = vmatpush1.msra.mxu0 0.0
    %1394 = vmatprep.mubr.f32.mxu0 0.0
    %1395 = vmatmul.mubr.f32.gmra.mrb[0].mxu0 %v1328
    %v1396 = vpop.f32.mrb[0].mxu0
    %v1397 = vadd.f32 0.0, %v1396
    %v1398 = vpop.f32.mrb[0].mxu0
    %1399 = vdwg.mxu0
    %v1400 = vadd.f32 %v1323, %v1397
    %v1401 = vxor.u32 %v1400, 2147483648
    %v1402 = vmul.f32 %v1401, 1.442695
    %v1403 = vpow.pop %v1402
    %v1404 = vadd.f32 %v1403, 1.0
    %v1405 = vrcp.pop %v1404
    %v1406 = vmul.f32 1.0, %v1405
    %v1407 = vtanh.pop %v1400
    %v1408 = vmul.f32 %v1406, %v1142
    %1410 = vrot.lane.b32.xlu0 %v1407, 64
    %v1411 = vpop.permute.xlu0 %1410
    %v1413 = vmul.f32 %v1406, %v1411
    %1415 = vrot.lane.b32.xlu0 %v1413, 32
    %v1416 = vpop.permute.xlu0 %1415
    %v1418 = vadd.f32 %v1408, %v1416
    %v1419 = vtanh.pop %v1418
    %1421 = vrot.lane.b32.xlu0 %v1419, 64
    %v1422 = vpop.permute.xlu0 %1421
    %v1424 = vmul.f32 %v1406, %v1422
    %vm1425 = vcmask 1048320
    %1426 = vst.msk [vmem:[#allocation3] sm:$0xff] %vm1425, %v1424
    %v1427 = vld [vmem:[#allocation2 + $0x28] sm:$0xff]
    %1429 = vrot.lane.b32.xlu0 %v1255, 32
    %v1430 = vpop.permute.xlu0 %1429
    %v1431 = vsel %vm235, %v1430, 0
    %1433 = vmatprep.subr.mxu0 0.0
    %1434 = vmatpush1.msra.mxu0 %v66
    %1435 = vmatprep.subr.mxu0 0.0
    %1436 = vmatpush1.msra.mxu0 %v67
    %1437 = vmatprep.subr.mxu0 0.0
    %1438 = vmatpush1.msra.mxu0 %v68
    %1439 = vmatprep.subr.mxu0 0.0
    %1440 = vmatpush1.msra.mxu0 %v69
    %1441 = vmatprep.subr.mxu0 0.0
    %1442 = vmatpush1.msra.mxu0 0.0
    %1443 = vmatprep.subr.mxu0 0.0
    %1444 = vmatpush1.msra.mxu0 0.0
    %1445 = vmatprep.subr.mxu0 0.0
    %1446 = vmatpush1.msra.mxu0 0.0
    %1447 = vmatprep.subr.mxu0 0.0
    %1448 = vmatpush1.msra.mxu0 0.0
    %1449 = vmatprep.subr.mxu0 0.0
    %1450 = vmatpush1.msra.mxu0 0.0
    %1451 = vmatprep.subr.mxu0 0.0
    %1452 = vmatpush1.msra.mxu0 0.0
    %1453 = vmatprep.subr.mxu0 0.0
    %1454 = vmatpush1.msra.mxu0 0.0
    %1455 = vmatprep.subr.mxu0 0.0
    %1456 = vmatpush1.msra.mxu0 0.0
    %1457 = vmatprep.subr.mxu0 0.0
    %1458 = vmatpush1.msra.mxu0 0.0
    %1459 = vmatprep.subr.mxu0 0.0
    %1460 = vmatpush1.msra.mxu0 0.0
    %1461 = vmatprep.subr.mxu0 0.0
    %1462 = vmatpush1.msra.mxu0 0.0
    %1463 = vmatprep.subr.mxu0 0.0
    %1464 = vmatpush1.msra.mxu0 0.0
    %1465 = vmatprep.subr.mxu0 0.0
    %1466 = vmatpush1.msra.mxu0 0.0
    %1467 = vmatprep.subr.mxu0 0.0
    %1468 = vmatpush1.msra.mxu0 0.0
    %1469 = vmatprep.subr.mxu0 0.0
    %1470 = vmatpush1.msra.mxu0 0.0
    %1471 = vmatprep.subr.mxu0 0.0
    %1472 = vmatpush1.msra.mxu0 0.0
    %1473 = vmatprep.subr.mxu0 0.0
    %1474 = vmatpush1.msra.mxu0 0.0
    %1475 = vmatprep.subr.mxu0 0.0
    %1476 = vmatpush1.msra.mxu0 0.0
    %1477 = vmatprep.subr.mxu0 0.0
    %1478 = vmatpush1.msra.mxu0 0.0
    %1479 = vmatprep.subr.mxu0 0.0
    %1480 = vmatpush1.msra.mxu0 0.0
    %1481 = vmatprep.subr.mxu0 0.0
    %1482 = vmatpush1.msra.mxu0 0.0
    %1483 = vmatprep.subr.mxu0 0.0
    %1484 = vmatpush1.msra.mxu0 0.0
    %1485 = vmatprep.subr.mxu0 0.0
    %1486 = vmatpush1.msra.mxu0 0.0
    %1487 = vmatprep.subr.mxu0 0.0
    %1488 = vmatpush1.msra.mxu0 0.0
    %1489 = vmatprep.subr.mxu0 0.0
    %1490 = vmatpush1.msra.mxu0 0.0
    %1491 = vmatprep.subr.mxu0 0.0
    %1492 = vmatpush1.msra.mxu0 0.0
    %1493 = vmatprep.subr.mxu0 0.0
    %1494 = vmatpush1.msra.mxu0 0.0
    %1495 = vmatprep.subr.mxu0 0.0
    %1496 = vmatpush1.msra.mxu0 0.0
    %1497 = vmatprep.mubr.f32.mxu0 0.0
    %1498 = vmatmul.mubr.f32.gmra.mrb[0].mxu0 %v1431
    %v1499 = vpop.f32.mrb[0].mxu0
    %v1500 = vadd.f32 0.0, %v1499
    %v1501 = vpop.f32.mrb[0].mxu0
    %1502 = vdwg.mxu0
    %v1503 = vadd.f32 %v1427, %v1500
    %v1504 = vxor.u32 %v1503, 2147483648
    %v1505 = vmul.f32 %v1504, 1.442695
    %v1506 = vpow.pop %v1505
    %v1507 = vadd.f32 %v1506, 1.0
    %v1508 = vrcp.pop %v1507
    %v1509 = vmul.f32 1.0, %v1508
    %v1510 = vtanh.pop %v1503
    %v1511 = vmul.f32 %v1509, %v1249
    %1513 = vrot.lane.b32.xlu0 %v1510, 64
    %v1514 = vpop.permute.xlu0 %1513
    %v1516 = vmul.f32 %v1509, %v1514
    %1518 = vrot.lane.b32.xlu0 %v1516, 32
    %v1519 = vpop.permute.xlu0 %1518
    %v1521 = vadd.f32 %v1511, %v1519
    %v1522 = vtanh.pop %v1521
    %1524 = vrot.lane.b32.xlu0 %v1522, 64
    %v1525 = vpop.permute.xlu0 %1524
    %v1527 = vmul.f32 %v1509, %v1525
    %1528 = vmatprep.subr.mxu0 0.0
    %1529 = vmatpush1.msra.mxu0 %v62
    %1530 = vmatprep.subr.mxu0 0.0
    %1531 = vmatpush1.msra.mxu0 %v63
    %1532 = vmatprep.subr.mxu0 0.0
    %1533 = vmatpush1.msra.mxu0 %v64
    %1534 = vmatprep.subr.mxu0 0.0
    %1535 = vmatpush1.msra.mxu0 %v65
    %1536 = vmatprep.subr.mxu0 0.0
    %1537 = vmatpush1.msra.mxu0 0.0
    %1538 = vmatprep.subr.mxu0 0.0
    %1539 = vmatpush1.msra.mxu0 0.0
    %1540 = vmatprep.subr.mxu0 0.0
    %1541 = vmatpush1.msra.mxu0 0.0
    %1542 = vmatprep.subr.mxu0 0.0
    %1543 = vmatpush1.msra.mxu0 0.0
    %1544 = vmatprep.subr.mxu0 0.0
    %1545 = vmatpush1.msra.mxu0 0.0
    %1546 = vmatprep.subr.mxu0 0.0
    %1547 = vmatpush1.msra.mxu0 0.0
    %1548 = vmatprep.subr.mxu0 0.0
    %1549 = vmatpush1.msra.mxu0 0.0
    %1550 = vmatprep.subr.mxu0 0.0
    %1551 = vmatpush1.msra.mxu0 0.0
    %1552 = vmatprep.subr.mxu0 0.0
    %1553 = vmatpush1.msra.mxu0 0.0
    %1554 = vmatprep.subr.mxu0 0.0
    %1555 = vmatpush1.msra.mxu0 0.0
    %1556 = vmatprep.subr.mxu0 0.0
    %1557 = vmatpush1.msra.mxu0 0.0
    %1558 = vmatprep.subr.mxu0 0.0
    %1559 = vmatpush1.msra.mxu0 0.0
    %1560 = vmatprep.subr.mxu0 0.0
    %1561 = vmatpush1.msra.mxu0 0.0
    %1562 = vmatprep.subr.mxu0 0.0
    %1563 = vmatpush1.msra.mxu0 0.0
    %1564 = vmatprep.subr.mxu0 0.0
    %1565 = vmatpush1.msra.mxu0 0.0
    %1566 = vmatprep.subr.mxu0 0.0
    %1567 = vmatpush1.msra.mxu0 0.0
    %1568 = vmatprep.subr.mxu0 0.0
    %1569 = vmatpush1.msra.mxu0 0.0
    %1570 = vmatprep.subr.mxu0 0.0
    %1571 = vmatpush1.msra.mxu0 0.0
    %1572 = vmatprep.subr.mxu0 0.0
    %1573 = vmatpush1.msra.mxu0 0.0
    %1574 = vmatprep.subr.mxu0 0.0
    %1575 = vmatpush1.msra.mxu0 0.0
    %1576 = vmatprep.subr.mxu0 0.0
    %1577 = vmatpush1.msra.mxu0 0.0
    %1578 = vmatprep.subr.mxu0 0.0
    %1579 = vmatpush1.msra.mxu0 0.0
    %1580 = vmatprep.subr.mxu0 0.0
    %1581 = vmatpush1.msra.mxu0 0.0
    %1582 = vmatprep.subr.mxu0 0.0
    %1583 = vmatpush1.msra.mxu0 0.0
    %1584 = vmatprep.subr.mxu0 0.0
    %1585 = vmatpush1.msra.mxu0 0.0
    %1586 = vmatprep.subr.mxu0 0.0
    %1587 = vmatpush1.msra.mxu0 0.0
    %1588 = vmatprep.subr.mxu0 0.0
    %1589 = vmatpush1.msra.mxu0 0.0
    %1590 = vmatprep.subr.mxu0 0.0
    %1591 = vmatpush1.msra.mxu0 0.0
    %1592 = vmatprep.mubr.f32.mxu0 0.0
    %1593 = vmatmul.mubr.f32.gmra.mrb[0].mxu0 %v1431
    %v1594 = vpop.f32.mrb[0].mxu0
    %v1595 = vadd.f32 %v232, %v1594
    %v1596 = vpop.f32.mrb[0].mxu0
    %1597 = vdwg.mxu0
    %1599 = vrot.lane.b32.xlu0 %v1424, 32
    %v1600 = vpop.permute.xlu0 %1599
    %v1601 = vsel %vm235, %v1600, 0
    %1603 = vmatprep.subr.mxu0 0.0
    %1604 = vmatpush1.msra.mxu0 %v70
    %1605 = vmatprep.subr.mxu0 0.0
    %1606 = vmatpush1.msra.mxu0 %v71
    %1607 = vmatprep.subr.mxu0 0.0
    %1608 = vmatpush1.msra.mxu0 %v72
    %1609 = vmatprep.subr.mxu0 0.0
    %1610 = vmatpush1.msra.mxu0 %v73
    %1611 = vmatprep.subr.mxu0 0.0
    %1612 = vmatpush1.msra.mxu0 0.0
    %1613 = vmatprep.subr.mxu0 0.0
    %1614 = vmatpush1.msra.mxu0 0.0
    %1615 = vmatprep.subr.mxu0 0.0
    %1616 = vmatpush1.msra.mxu0 0.0
    %1617 = vmatprep.subr.mxu0 0.0
    %1618 = vmatpush1.msra.mxu0 0.0
    %1619 = vmatprep.subr.mxu0 0.0
    %1620 = vmatpush1.msra.mxu0 0.0
    %1621 = vmatprep.subr.mxu0 0.0
    %1622 = vmatpush1.msra.mxu0 0.0
    %1623 = vmatprep.subr.mxu0 0.0
    %1624 = vmatpush1.msra.mxu0 0.0
    %1625 = vmatprep.subr.mxu0 0.0
    %1626 = vmatpush1.msra.mxu0 0.0
    %1627 = vmatprep.subr.mxu0 0.0
    %1628 = vmatpush1.msra.mxu0 0.0
    %1629 = vmatprep.subr.mxu0 0.0
    %1630 = vmatpush1.msra.mxu0 0.0
    %1631 = vmatprep.subr.mxu0 0.0
    %1632 = vmatpush1.msra.mxu0 0.0
    %1633 = vmatprep.subr.mxu0 0.0
    %1634 = vmatpush1.msra.mxu0 0.0
    %1635 = vmatprep.subr.mxu0 0.0
    %1636 = vmatpush1.msra.mxu0 0.0
    %1637 = vmatprep.subr.mxu0 0.0
    %1638 = vmatpush1.msra.mxu0 0.0
    %1639 = vmatprep.subr.mxu0 0.0
    %1640 = vmatpush1.msra.mxu0 0.0
    %1641 = vmatprep.subr.mxu0 0.0
    %1642 = vmatpush1.msra.mxu0 0.0
    %1643 = vmatprep.subr.mxu0 0.0
    %1644 = vmatpush1.msra.mxu0 0.0
    %1645 = vmatprep.subr.mxu0 0.0
    %1646 = vmatpush1.msra.mxu0 0.0
    %1647 = vmatprep.subr.mxu0 0.0
    %1648 = vmatpush1.msra.mxu0 0.0
    %1649 = vmatprep.subr.mxu0 0.0
    %1650 = vmatpush1.msra.mxu0 0.0
    %1651 = vmatprep.subr.mxu0 0.0
    %1652 = vmatpush1.msra.mxu0 0.0
    %1653 = vmatprep.subr.mxu0 0.0
    %1654 = vmatpush1.msra.mxu0 0.0
    %1655 = vmatprep.subr.mxu0 0.0
    %1656 = vmatpush1.msra.mxu0 0.0
    %1657 = vmatprep.subr.mxu0 0.0
    %1658 = vmatpush1.msra.mxu0 0.0
    %1659 = vmatprep.subr.mxu0 0.0
    %1660 = vmatpush1.msra.mxu0 0.0
    %1661 = vmatprep.subr.mxu0 0.0
    %1662 = vmatpush1.msra.mxu0 0.0
    %1663 = vmatprep.subr.mxu0 0.0
    %1664 = vmatpush1.msra.mxu0 0.0
    %1665 = vmatprep.subr.mxu0 0.0
    %1666 = vmatpush1.msra.mxu0 0.0
    %1667 = vmatprep.mubr.f32.mxu0 0.0
    %1668 = vmatmul.mubr.f32.gmra.mrb[0].mxu0 %v1601
    %v1669 = vpop.f32.mrb[0].mxu0
    %v1670 = vadd.f32 0.0, %v1669
    %v1671 = vpop.f32.mrb[0].mxu0
    %1672 = vdwg.mxu0
    %v1673 = vadd.f32 %v1595, %v1670
    %v1674 = vxor.u32 %v1673, 2147483648
    %v1675 = vmul.f32 %v1674, 1.442695
    %v1676 = vpow.pop %v1675
    %v1677 = vadd.f32 %v1676, 1.0
    %v1678 = vrcp.pop %v1677
    %v1679 = vmul.f32 1.0, %v1678
    %v1680 = vtanh.pop %v1673
    %v1681 = vmul.f32 %v1679, %v1418
    %1683 = vrot.lane.b32.xlu0 %v1680, 64
    %v1684 = vpop.permute.xlu0 %1683
    %v1686 = vmul.f32 %v1679, %v1684
    %1688 = vrot.lane.b32.xlu0 %v1686, 32
    %v1689 = vpop.permute.xlu0 %1688
    %v1691 = vadd.f32 %v1681, %v1689
    %v1692 = vtanh.pop %v1691
    %1694 = vrot.lane.b32.xlu0 %v1692, 64
    %v1695 = vpop.permute.xlu0 %1694
    %v1697 = vmul.f32 %v1679, %v1695
    %1699 = vrot.lane.b32.xlu0 %v1697, 32
    %v1700 = vpop.permute.xlu0 %1699
    %1702 = vst.msk [vmem:[#allocation3 + $0x8] sm:$0xff] %vm235, %v1700
    %v1703 = vld [vmem:[#allocation2 + $0x30] sm:$0xff]
    %1705 = vrot.lane.b32.xlu0 %v1527, 32
    %v1706 = vpop.permute.xlu0 %1705
    %v1707 = vsel %vm235, %v1706, 0
    %1709 = vmatprep.subr.mxu0 0.0
    %1710 = vmatpush1.msra.mxu0 %v66
    %1711 = vmatprep.subr.mxu0 0.0
    %1712 = vmatpush1.msra.mxu0 %v67
    %1713 = vmatprep.subr.mxu0 0.0
    %1714 = vmatpush1.msra.mxu0 %v68
    %1715 = vmatprep.subr.mxu0 0.0
    %1716 = vmatpush1.msra.mxu0 %v69
    %1717 = vmatprep.subr.mxu0 0.0
    %1718 = vmatpush1.msra.mxu0 0.0
    %1719 = vmatprep.subr.mxu0 0.0
    %1720 = vmatpush1.msra.mxu0 0.0
    %1721 = vmatprep.subr.mxu0 0.0
    %1722 = vmatpush1.msra.mxu0 0.0
    %1723 = vmatprep.subr.mxu0 0.0
    %1724 = vmatpush1.msra.mxu0 0.0
    %1725 = vmatprep.subr.mxu0 0.0
    %1726 = vmatpush1.msra.mxu0 0.0
    %1727 = vmatprep.subr.mxu0 0.0
    %1728 = vmatpush1.msra.mxu0 0.0
    %1729 = vmatprep.subr.mxu0 0.0
    %1730 = vmatpush1.msra.mxu0 0.0
    %1731 = vmatprep.subr.mxu0 0.0
    %1732 = vmatpush1.msra.mxu0 0.0
    %1733 = vmatprep.subr.mxu0 0.0
    %1734 = vmatpush1.msra.mxu0 0.0
    %1735 = vmatprep.subr.mxu0 0.0
    %1736 = vmatpush1.msra.mxu0 0.0
    %1737 = vmatprep.subr.mxu0 0.0
    %1738 = vmatpush1.msra.mxu0 0.0
    %1739 = vmatprep.subr.mxu0 0.0
    %1740 = vmatpush1.msra.mxu0 0.0
    %1741 = vmatprep.subr.mxu0 0.0
    %1742 = vmatpush1.msra.mxu0 0.0
    %1743 = vmatprep.subr.mxu0 0.0
    %1744 = vmatpush1.msra.mxu0 0.0
    %1745 = vmatprep.subr.mxu0 0.0
    %1746 = vmatpush1.msra.mxu0 0.0
    %1747 = vmatprep.subr.mxu0 0.0
    %1748 = vmatpush1.msra.mxu0 0.0
    %1749 = vmatprep.subr.mxu0 0.0
    %1750 = vmatpush1.msra.mxu0 0.0
    %1751 = vmatprep.subr.mxu0 0.0
    %1752 = vmatpush1.msra.mxu0 0.0
    %1753 = vmatprep.subr.mxu0 0.0
    %1754 = vmatpush1.msra.mxu0 0.0
    %1755 = vmatprep.subr.mxu0 0.0
    %1756 = vmatpush1.msra.mxu0 0.0
    %1757 = vmatprep.subr.mxu0 0.0
    %1758 = vmatpush1.msra.mxu0 0.0
    %1759 = vmatprep.subr.mxu0 0.0
    %1760 = vmatpush1.msra.mxu0 0.0
    %1761 = vmatprep.subr.mxu0 0.0
    %1762 = vmatpush1.msra.mxu0 0.0
    %1763 = vmatprep.subr.mxu0 0.0
    %1764 = vmatpush1.msra.mxu0 0.0
    %1765 = vmatprep.subr.mxu0 0.0
    %1766 = vmatpush1.msra.mxu0 0.0
    %1767 = vmatprep.subr.mxu0 0.0
    %1768 = vmatpush1.msra.mxu0 0.0
    %1769 = vmatprep.subr.mxu0 0.0
    %1770 = vmatpush1.msra.mxu0 0.0
    %1771 = vmatprep.subr.mxu0 0.0
    %1772 = vmatpush1.msra.mxu0 0.0
    %1773 = vmatprep.mubr.f32.mxu0 0.0
    %1774 = vmatmul.mubr.f32.gmra.mrb[0].mxu0 %v1707
    %v1775 = vpop.f32.mrb[0].mxu0
    %v1776 = vadd.f32 0.0, %v1775
    %v1777 = vpop.f32.mrb[0].mxu0
    %1778 = vdwg.mxu0
    %v1779 = vadd.f32 %v1703, %v1776
    %v1780 = vxor.u32 %v1779, 2147483648
    %v1781 = vmul.f32 %v1780, 1.442695
    %v1782 = vpow.pop %v1781
    %v1783 = vadd.f32 %v1782, 1.0
    %v1784 = vrcp.pop %v1783
    %v1785 = vmul.f32 1.0, %v1784
    %v1786 = vtanh.pop %v1779
    %v1787 = vmul.f32 %v1785, %v1521
    %1789 = vrot.lane.b32.xlu0 %v1786, 64
    %v1790 = vpop.permute.xlu0 %1789
    %v1792 = vmul.f32 %v1785, %v1790
    %1794 = vrot.lane.b32.xlu0 %v1792, 32
    %v1795 = vpop.permute.xlu0 %1794
    %v1797 = vadd.f32 %v1787, %v1795
    %v1798 = vtanh.pop %v1797
    %1800 = vrot.lane.b32.xlu0 %v1798, 64
    %v1801 = vpop.permute.xlu0 %1800
    %v1803 = vmul.f32 %v1785, %v1801
    %1804 = vmatprep.subr.mxu0 0.0
    %1805 = vmatpush1.msra.mxu0 %v62
    %1806 = vmatprep.subr.mxu0 0.0
    %1807 = vmatpush1.msra.mxu0 %v63
    %1808 = vmatprep.subr.mxu0 0.0
    %1809 = vmatpush1.msra.mxu0 %v64
    %1810 = vmatprep.subr.mxu0 0.0
    %1811 = vmatpush1.msra.mxu0 %v65
    %1812 = vmatprep.subr.mxu0 0.0
    %1813 = vmatpush1.msra.mxu0 0.0
    %1814 = vmatprep.subr.mxu0 0.0
    %1815 = vmatpush1.msra.mxu0 0.0
    %1816 = vmatprep.subr.mxu0 0.0
    %1817 = vmatpush1.msra.mxu0 0.0
    %1818 = vmatprep.subr.mxu0 0.0
    %1819 = vmatpush1.msra.mxu0 0.0
    %1820 = vmatprep.subr.mxu0 0.0
    %1821 = vmatpush1.msra.mxu0 0.0
    %1822 = vmatprep.subr.mxu0 0.0
    %1823 = vmatpush1.msra.mxu0 0.0
    %1824 = vmatprep.subr.mxu0 0.0
    %1825 = vmatpush1.msra.mxu0 0.0
    %1826 = vmatprep.subr.mxu0 0.0
    %1827 = vmatpush1.msra.mxu0 0.0
    %1828 = vmatprep.subr.mxu0 0.0
    %1829 = vmatpush1.msra.mxu0 0.0
    %1830 = vmatprep.subr.mxu0 0.0
    %1831 = vmatpush1.msra.mxu0 0.0
    %1832 = vmatprep.subr.mxu0 0.0
    %1833 = vmatpush1.msra.mxu0 0.0
    %1834 = vmatprep.subr.mxu0 0.0
    %1835 = vmatpush1.msra.mxu0 0.0
    %1836 = vmatprep.subr.mxu0 0.0
    %1837 = vmatpush1.msra.mxu0 0.0
    %1838 = vmatprep.subr.mxu0 0.0
    %1839 = vmatpush1.msra.mxu0 0.0
    %1840 = vmatprep.subr.mxu0 0.0
    %1841 = vmatpush1.msra.mxu0 0.0
    %1842 = vmatprep.subr.mxu0 0.0
    %1843 = vmatpush1.msra.mxu0 0.0
    %1844 = vmatprep.subr.mxu0 0.0
    %1845 = vmatpush1.msra.mxu0 0.0
    %1846 = vmatprep.subr.mxu0 0.0
    %1847 = vmatpush1.msra.mxu0 0.0
    %1848 = vmatprep.subr.mxu0 0.0
    %1849 = vmatpush1.msra.mxu0 0.0
    %1850 = vmatprep.subr.mxu0 0.0
    %1851 = vmatpush1.msra.mxu0 0.0
    %1852 = vmatprep.subr.mxu0 0.0
    %1853 = vmatpush1.msra.mxu0 0.0
    %1854 = vmatprep.subr.mxu0 0.0
    %1855 = vmatpush1.msra.mxu0 0.0
    %1856 = vmatprep.subr.mxu0 0.0
    %1857 = vmatpush1.msra.mxu0 0.0
    %1858 = vmatprep.subr.mxu0 0.0
    %1859 = vmatpush1.msra.mxu0 0.0
    %1860 = vmatprep.subr.mxu0 0.0
    %1861 = vmatpush1.msra.mxu0 0.0
    %1862 = vmatprep.subr.mxu0 0.0
    %1863 = vmatpush1.msra.mxu0 0.0
    %1864 = vmatprep.subr.mxu0 0.0
    %1865 = vmatpush1.msra.mxu0 0.0
    %1866 = vmatprep.subr.mxu0 0.0
    %1867 = vmatpush1.msra.mxu0 0.0
    %1868 = vmatprep.mubr.f32.mxu0 0.0
    %1869 = vmatmul.mubr.f32.gmra.mrb[0].mxu0 %v1707
    %v1870 = vpop.f32.mrb[0].mxu0
    %v1871 = vadd.f32 %v232, %v1870
    %v1872 = vpop.f32.mrb[0].mxu0
    %1873 = vdwg.mxu0
    %v1874 = vsel %vm235, %v1700, 0
    %1876 = vmatprep.subr.mxu0 0.0
    %1877 = vmatpush1.msra.mxu0 %v70
    %1878 = vmatprep.subr.mxu0 0.0
    %1879 = vmatpush1.msra.mxu0 %v71
    %1880 = vmatprep.subr.mxu0 0.0
    %1881 = vmatpush1.msra.mxu0 %v72
    %1882 = vmatprep.subr.mxu0 0.0
    %1883 = vmatpush1.msra.mxu0 %v73
    %1884 = vmatprep.subr.mxu0 0.0
    %1885 = vmatpush1.msra.mxu0 0.0
    %1886 = vmatprep.subr.mxu0 0.0
    %1887 = vmatpush1.msra.mxu0 0.0
    %1888 = vmatprep.subr.mxu0 0.0
    %1889 = vmatpush1.msra.mxu0 0.0
    %1890 = vmatprep.subr.mxu0 0.0
    %1891 = vmatpush1.msra.mxu0 0.0
    %1892 = vmatprep.subr.mxu0 0.0
    %1893 = vmatpush1.msra.mxu0 0.0
    %1894 = vmatprep.subr.mxu0 0.0
    %1895 = vmatpush1.msra.mxu0 0.0
    %1896 = vmatprep.subr.mxu0 0.0
    %1897 = vmatpush1.msra.mxu0 0.0
    %1898 = vmatprep.subr.mxu0 0.0
    %1899 = vmatpush1.msra.mxu0 0.0
    %1900 = vmatprep.subr.mxu0 0.0
    %1901 = vmatpush1.msra.mxu0 0.0
    %1902 = vmatprep.subr.mxu0 0.0
    %1903 = vmatpush1.msra.mxu0 0.0
    %1904 = vmatprep.subr.mxu0 0.0
    %1905 = vmatpush1.msra.mxu0 0.0
    %1906 = vmatprep.subr.mxu0 0.0
    %1907 = vmatpush1.msra.mxu0 0.0
    %1908 = vmatprep.subr.mxu0 0.0
    %1909 = vmatpush1.msra.mxu0 0.0
    %1910 = vmatprep.subr.mxu0 0.0
    %1911 = vmatpush1.msra.mxu0 0.0
    %1912 = vmatprep.subr.mxu0 0.0
    %1913 = vmatpush1.msra.mxu0 0.0
    %1914 = vmatprep.subr.mxu0 0.0
    %1915 = vmatpush1.msra.mxu0 0.0
    %1916 = vmatprep.subr.mxu0 0.0
    %1917 = vmatpush1.msra.mxu0 0.0
    %1918 = vmatprep.subr.mxu0 0.0
    %1919 = vmatpush1.msra.mxu0 0.0
    %1920 = vmatprep.subr.mxu0 0.0
    %1921 = vmatpush1.msra.mxu0 0.0
    %1922 = vmatprep.subr.mxu0 0.0
    %1923 = vmatpush1.msra.mxu0 0.0
    %1924 = vmatprep.subr.mxu0 0.0
    %1925 = vmatpush1.msra.mxu0 0.0
    %1926 = vmatprep.subr.mxu0 0.0
    %1927 = vmatpush1.msra.mxu0 0.0
    %1928 = vmatprep.subr.mxu0 0.0
    %1929 = vmatpush1.msra.mxu0 0.0
    %1930 = vmatprep.subr.mxu0 0.0
    %1931 = vmatpush1.msra.mxu0 0.0
    %1932 = vmatprep.subr.mxu0 0.0
    %1933 = vmatpush1.msra.mxu0 0.0
    %1934 = vmatprep.subr.mxu0 0.0
    %1935 = vmatpush1.msra.mxu0 0.0
    %1936 = vmatprep.subr.mxu0 0.0
    %1937 = vmatpush1.msra.mxu0 0.0
    %1938 = vmatprep.subr.mxu0 0.0
    %1939 = vmatpush1.msra.mxu0 0.0
    %1940 = vmatprep.mubr.f32.mxu0 0.0
    %1941 = vmatmul.mubr.f32.gmra.mrb[0].mxu0 %v1874
    %v1942 = vpop.f32.mrb[0].mxu0
    %v1943 = vadd.f32 0.0, %v1942
    %v1944 = vpop.f32.mrb[0].mxu0
    %1945 = vdwg.mxu0
    %v1946 = vadd.f32 %v1871, %v1943
    %v1947 = vxor.u32 %v1946, 2147483648
    %v1948 = vmul.f32 %v1947, 1.442695
    %v1949 = vpow.pop %v1948
    %v1950 = vadd.f32 %v1949, 1.0
    %v1951 = vrcp.pop %v1950
    %v1952 = vmul.f32 1.0, %v1951
    %v1953 = vtanh.pop %v1946
    %v1954 = vmul.f32 %v1952, %v1691
    %1956 = vrot.lane.b32.xlu0 %v1953, 64
    %v1957 = vpop.permute.xlu0 %1956
    %v1959 = vmul.f32 %v1952, %v1957
    %1961 = vrot.lane.b32.xlu0 %v1959, 32
    %v1962 = vpop.permute.xlu0 %1961
    %v1964 = vadd.f32 %v1954, %v1962
    %v1965 = vtanh.pop %v1964
    %1967 = vrot.lane.b32.xlu0 %v1965, 64
    %v1968 = vpop.permute.xlu0 %1967
    %v1970 = vmul.f32 %v1952, %v1968
    %1972 = vrot.lane.b32.xlu0 %v1970, 64
    %v1973 = vpop.permute.xlu0 %1972
    %1975 = vst.msk [vmem:[#allocation3 + $0x8] sm:$0xff] %vm877, %v1973
    %v1976 = vld [vmem:[#allocation2 + $0x38] sm:$0xff]
    %1978 = vrot.lane.b32.xlu0 %v1803, 32
    %v1979 = vpop.permute.xlu0 %1978
    %v1980 = vsel %vm235, %v1979, 0
    %1982 = vmatprep.subr.mxu0 0.0
    %1983 = vmatpush1.msra.mxu0 %v66
    %1984 = vmatprep.subr.mxu0 0.0
    %1985 = vmatpush1.msra.mxu0 %v67
    %1986 = vmatprep.subr.mxu0 0.0
    %1987 = vmatpush1.msra.mxu0 %v68
    %1988 = vmatprep.subr.mxu0 0.0
    %1989 = vmatpush1.msra.mxu0 %v69
    %1990 = vmatprep.subr.mxu0 0.0
    %1991 = vmatpush1.msra.mxu0 0.0
    %1992 = vmatprep.subr.mxu0 0.0
    %1993 = vmatpush1.msra.mxu0 0.0
    %1994 = vmatprep.subr.mxu0 0.0
    %1995 = vmatpush1.msra.mxu0 0.0
    %1996 = vmatprep.subr.mxu0 0.0
    %1997 = vmatpush1.msra.mxu0 0.0
    %1998 = vmatprep.subr.mxu0 0.0
    %1999 = vmatpush1.msra.mxu0 0.0
    %2000 = vmatprep.subr.mxu0 0.0
    %2001 = vmatpush1.msra.mxu0 0.0
    %2002 = vmatprep.subr.mxu0 0.0
    %2003 = vmatpush1.msra.mxu0 0.0
    %2004 = vmatprep.subr.mxu0 0.0
    %2005 = vmatpush1.msra.mxu0 0.0
    %2006 = vmatprep.subr.mxu0 0.0
    %2007 = vmatpush1.msra.mxu0 0.0
    %2008 = vmatprep.subr.mxu0 0.0
    %2009 = vmatpush1.msra.mxu0 0.0
    %2010 = vmatprep.subr.mxu0 0.0
    %2011 = vmatpush1.msra.mxu0 0.0
    %2012 = vmatprep.subr.mxu0 0.0
    %2013 = vmatpush1.msra.mxu0 0.0
    %2014 = vmatprep.subr.mxu0 0.0
    %2015 = vmatpush1.msra.mxu0 0.0
    %2016 = vmatprep.subr.mxu0 0.0
    %2017 = vmatpush1.msra.mxu0 0.0
    %2018 = vmatprep.subr.mxu0 0.0
    %2019 = vmatpush1.msra.mxu0 0.0
    %2020 = vmatprep.subr.mxu0 0.0
    %2021 = vmatpush1.msra.mxu0 0.0
    %2022 = vmatprep.subr.mxu0 0.0
    %2023 = vmatpush1.msra.mxu0 0.0
    %2024 = vmatprep.subr.mxu0 0.0
    %2025 = vmatpush1.msra.mxu0 0.0
    %2026 = vmatprep.subr.mxu0 0.0
    %2027 = vmatpush1.msra.mxu0 0.0
    %2028 = vmatprep.subr.mxu0 0.0
    %2029 = vmatpush1.msra.mxu0 0.0
    %2030 = vmatprep.subr.mxu0 0.0
    %2031 = vmatpush1.msra.mxu0 0.0
    %2032 = vmatprep.subr.mxu0 0.0
    %2033 = vmatpush1.msra.mxu0 0.0
    %2034 = vmatprep.subr.mxu0 0.0
    %2035 = vmatpush1.msra.mxu0 0.0
    %2036 = vmatprep.subr.mxu0 0.0
    %2037 = vmatpush1.msra.mxu0 0.0
    %2038 = vmatprep.subr.mxu0 0.0
    %2039 = vmatpush1.msra.mxu0 0.0
    %2040 = vmatprep.subr.mxu0 0.0
    %2041 = vmatpush1.msra.mxu0 0.0
    %2042 = vmatprep.subr.mxu0 0.0
    %2043 = vmatpush1.msra.mxu0 0.0
    %2044 = vmatprep.subr.mxu0 0.0
    %2045 = vmatpush1.msra.mxu0 0.0
    %2046 = vmatprep.mubr.f32.mxu0 0.0
    %2047 = vmatmul.mubr.f32.gmra.mrb[0].mxu0 %v1980
    %v2048 = vpop.f32.mrb[0].mxu0
    %v2049 = vadd.f32 0.0, %v2048
    %v2050 = vpop.f32.mrb[0].mxu0
    %2051 = vdwg.mxu0
    %v2052 = vadd.f32 %v1976, %v2049
    %v2053 = vxor.u32 %v2052, 2147483648
    %v2054 = vmul.f32 %v2053, 1.442695
    %v2055 = vpow.pop %v2054
    %v2056 = vadd.f32 %v2055, 1.0
    %v2057 = vrcp.pop %v2056
    %v2058 = vmul.f32 1.0, %v2057
    %v2059 = vtanh.pop %v2052
    %v2060 = vmul.f32 %v2058, %v1797
    %2062 = vrot.lane.b32.xlu0 %v2059, 64
    %v2063 = vpop.permute.xlu0 %2062
    %v2065 = vmul.f32 %v2058, %v2063
    %2067 = vrot.lane.b32.xlu0 %v2065, 32
    %v2068 = vpop.permute.xlu0 %2067
    %v2070 = vadd.f32 %v2060, %v2068
    %v2071 = vtanh.pop %v2070
    %2073 = vrot.lane.b32.xlu0 %v2071, 64
    %v2074 = vpop.permute.xlu0 %2073
    %v2076 = vmul.f32 %v2058, %v2074
    %2077 = vmatprep.subr.mxu0 0.0
    %2078 = vmatpush1.msra.mxu0 %v62
    %2079 = vmatprep.subr.mxu0 0.0
    %2080 = vmatpush1.msra.mxu0 %v63
    %2081 = vmatprep.subr.mxu0 0.0
    %2082 = vmatpush1.msra.mxu0 %v64
    %2083 = vmatprep.subr.mxu0 0.0
    %2084 = vmatpush1.msra.mxu0 %v65
    %2085 = vmatprep.subr.mxu0 0.0
    %2086 = vmatpush1.msra.mxu0 0.0
    %2087 = vmatprep.subr.mxu0 0.0
    %2088 = vmatpush1.msra.mxu0 0.0
    %2089 = vmatprep.subr.mxu0 0.0
    %2090 = vmatpush1.msra.mxu0 0.0
    %2091 = vmatprep.subr.mxu0 0.0
    %2092 = vmatpush1.msra.mxu0 0.0
    %2093 = vmatprep.subr.mxu0 0.0
    %2094 = vmatpush1.msra.mxu0 0.0
    %2095 = vmatprep.subr.mxu0 0.0
    %2096 = vmatpush1.msra.mxu0 0.0
    %2097 = vmatprep.subr.mxu0 0.0
    %2098 = vmatpush1.msra.mxu0 0.0
    %2099 = vmatprep.subr.mxu0 0.0
    %2100 = vmatpush1.msra.mxu0 0.0
    %2101 = vmatprep.subr.mxu0 0.0
    %2102 = vmatpush1.msra.mxu0 0.0
    %2103 = vmatprep.subr.mxu0 0.0
    %2104 = vmatpush1.msra.mxu0 0.0
    %2105 = vmatprep.subr.mxu0 0.0
    %2106 = vmatpush1.msra.mxu0 0.0
    %2107 = vmatprep.subr.mxu0 0.0
    %2108 = vmatpush1.msra.mxu0 0.0
    %2109 = vmatprep.subr.mxu0 0.0
    %2110 = vmatpush1.msra.mxu0 0.0
    %2111 = vmatprep.subr.mxu0 0.0
    %2112 = vmatpush1.msra.mxu0 0.0
    %2113 = vmatprep.subr.mxu0 0.0
    %2114 = vmatpush1.msra.mxu0 0.0
    %2115 = vmatprep.subr.mxu0 0.0
    %2116 = vmatpush1.msra.mxu0 0.0
    %2117 = vmatprep.subr.mxu0 0.0
    %2118 = vmatpush1.msra.mxu0 0.0
    %2119 = vmatprep.subr.mxu0 0.0
    %2120 = vmatpush1.msra.mxu0 0.0
    %2121 = vmatprep.subr.mxu0 0.0
    %2122 = vmatpush1.msra.mxu0 0.0
    %2123 = vmatprep.subr.mxu0 0.0
    %2124 = vmatpush1.msra.mxu0 0.0
    %2125 = vmatprep.subr.mxu0 0.0
    %2126 = vmatpush1.msra.mxu0 0.0
    %2127 = vmatprep.subr.mxu0 0.0
    %2128 = vmatpush1.msra.mxu0 0.0
    %2129 = vmatprep.subr.mxu0 0.0
    %2130 = vmatpush1.msra.mxu0 0.0
    %2131 = vmatprep.subr.mxu0 0.0
    %2132 = vmatpush1.msra.mxu0 0.0
    %2133 = vmatprep.subr.mxu0 0.0
    %2134 = vmatpush1.msra.mxu0 0.0
    %2135 = vmatprep.subr.mxu0 0.0
    %2136 = vmatpush1.msra.mxu0 0.0
    %2137 = vmatprep.subr.mxu0 0.0
    %2138 = vmatpush1.msra.mxu0 0.0
    %2139 = vmatprep.subr.mxu0 0.0
    %2140 = vmatpush1.msra.mxu0 0.0
    %2141 = vmatprep.mubr.f32.mxu0 0.0
    %2142 = vmatmul.mubr.f32.gmra.mrb[0].mxu0 %v1980
    %v2143 = vpop.f32.mrb[0].mxu0
    %v2144 = vadd.f32 %v232, %v2143
    %v2145 = vpop.f32.mrb[0].mxu0
    %2146 = vdwg.mxu0
    %2147 = vrot.lane.b32.xlu0 %v1970, 32
    %v2148 = vpop.permute.xlu0 %2147
    %v2149 = vsel %vm235, %v2148, 0
    %2151 = vmatprep.subr.mxu0 0.0
    %2152 = vmatpush1.msra.mxu0 %v70
    %2153 = vmatprep.subr.mxu0 0.0
    %2154 = vmatpush1.msra.mxu0 %v71
    %2155 = vmatprep.subr.mxu0 0.0
    %2156 = vmatpush1.msra.mxu0 %v72
    %2157 = vmatprep.subr.mxu0 0.0
    %2158 = vmatpush1.msra.mxu0 %v73
    %2159 = vmatprep.subr.mxu0 0.0
    %2160 = vmatpush1.msra.mxu0 0.0
    %2161 = vmatprep.subr.mxu0 0.0
    %2162 = vmatpush1.msra.mxu0 0.0
    %2163 = vmatprep.subr.mxu0 0.0
    %2164 = vmatpush1.msra.mxu0 0.0
    %2165 = vmatprep.subr.mxu0 0.0
    %2166 = vmatpush1.msra.mxu0 0.0
    %2167 = vmatprep.subr.mxu0 0.0
    %2168 = vmatpush1.msra.mxu0 0.0
    %2169 = vmatprep.subr.mxu0 0.0
    %2170 = vmatpush1.msra.mxu0 0.0
    %2171 = vmatprep.subr.mxu0 0.0
    %2172 = vmatpush1.msra.mxu0 0.0
    %2173 = vmatprep.subr.mxu0 0.0
    %2174 = vmatpush1.msra.mxu0 0.0
    %2175 = vmatprep.subr.mxu0 0.0
    %2176 = vmatpush1.msra.mxu0 0.0
    %2177 = vmatprep.subr.mxu0 0.0
    %2178 = vmatpush1.msra.mxu0 0.0
    %2179 = vmatprep.subr.mxu0 0.0
    %2180 = vmatpush1.msra.mxu0 0.0
    %2181 = vmatprep.subr.mxu0 0.0
    %2182 = vmatpush1.msra.mxu0 0.0
    %2183 = vmatprep.subr.mxu0 0.0
    %2184 = vmatpush1.msra.mxu0 0.0
    %2185 = vmatprep.subr.mxu0 0.0
    %2186 = vmatpush1.msra.mxu0 0.0
    %2187 = vmatprep.subr.mxu0 0.0
    %2188 = vmatpush1.msra.mxu0 0.0
    %2189 = vmatprep.subr.mxu0 0.0
    %2190 = vmatpush1.msra.mxu0 0.0
    %2191 = vmatprep.subr.mxu0 0.0
    %2192 = vmatpush1.msra.mxu0 0.0
    %2193 = vmatprep.subr.mxu0 0.0
    %2194 = vmatpush1.msra.mxu0 0.0
    %2195 = vmatprep.subr.mxu0 0.0
    %2196 = vmatpush1.msra.mxu0 0.0
    %2197 = vmatprep.subr.mxu0 0.0
    %2198 = vmatpush1.msra.mxu0 0.0
    %2199 = vmatprep.subr.mxu0 0.0
    %2200 = vmatpush1.msra.mxu0 0.0
    %2201 = vmatprep.subr.mxu0 0.0
    %2202 = vmatpush1.msra.mxu0 0.0
    %2203 = vmatprep.subr.mxu0 0.0
    %2204 = vmatpush1.msra.mxu0 0.0
    %2205 = vmatprep.subr.mxu0 0.0
    %2206 = vmatpush1.msra.mxu0 0.0
    %2207 = vmatprep.subr.mxu0 0.0
    %2208 = vmatpush1.msra.mxu0 0.0
    %2209 = vmatprep.subr.mxu0 0.0
    %2210 = vmatpush1.msra.mxu0 0.0
    %2211 = vmatprep.subr.mxu0 0.0
    %2212 = vmatpush1.msra.mxu0 0.0
    %2213 = vmatprep.subr.mxu0 0.0
    %2214 = vmatpush1.msra.mxu0 0.0
    %2215 = vmatprep.mubr.f32.mxu0 0.0
    %2216 = vmatmul.mubr.f32.gmra.mrb[0].mxu0 %v2149
    %v2217 = vpop.f32.mrb[0].mxu0
    %v2218 = vadd.f32 0.0, %v2217
    %v2219 = vpop.f32.mrb[0].mxu0
    %2220 = vdwg.mxu0
    %v2221 = vadd.f32 %v2144, %v2218
    %v2222 = vxor.u32 %v2221, 2147483648
    %v2223 = vmul.f32 %v2222, 1.442695
    %v2224 = vpow.pop %v2223
    %v2225 = vadd.f32 %v2224, 1.0
    %v2226 = vrcp.pop %v2225
    %v2227 = vmul.f32 1.0, %v2226
    %v2228 = vtanh.pop %v2221
    %v2229 = vmul.f32 %v2227, %v1964
    %2231 = vrot.lane.b32.xlu0 %v2228, 64
    %v2232 = vpop.permute.xlu0 %2231
    %v2234 = vmul.f32 %v2227, %v2232
    %2236 = vrot.lane.b32.xlu0 %v2234, 32
    %v2237 = vpop.permute.xlu0 %2236
    %v2239 = vadd.f32 %v2229, %v2237
    %v2240 = vtanh.pop %v2239
    %2242 = vrot.lane.b32.xlu0 %v2240, 64
    %v2243 = vpop.permute.xlu0 %2242
    %v2245 = vmul.f32 %v2227, %v2243
    %2247 = vrot.lane.b32.xlu0 %v2245, 96
    %v2248 = vpop.permute.xlu0 %2247
    %2250 = vst.msk [vmem:[#allocation3 + $0x8] sm:$0xff] %vm1153, %v2248
    %2252 = vrot.lane.b32.xlu0 %v2076, 32
    %v2253 = vpop.permute.xlu0 %2252
    %v2254 = vsel %vm235, %v2253, 0
    %2256 = vmatprep.subr.mxu0 0.0
    %2257 = vmatpush1.msra.mxu0 %v62
    %2258 = vmatprep.subr.mxu0 0.0
    %2259 = vmatpush1.msra.mxu0 %v63
    %2260 = vmatprep.subr.mxu0 0.0
    %2261 = vmatpush1.msra.mxu0 %v64
    %2262 = vmatprep.subr.mxu0 0.0
    %2263 = vmatpush1.msra.mxu0 %v65
    %2264 = vmatprep.subr.mxu0 0.0
    %2265 = vmatpush1.msra.mxu0 0.0
    %2266 = vmatprep.subr.mxu0 0.0
    %2267 = vmatpush1.msra.mxu0 0.0
    %2268 = vmatprep.subr.mxu0 0.0
    %2269 = vmatpush1.msra.mxu0 0.0
    %2270 = vmatprep.subr.mxu0 0.0
    %2271 = vmatpush1.msra.mxu0 0.0
    %2272 = vmatprep.subr.mxu0 0.0
    %2273 = vmatpush1.msra.mxu0 0.0
    %2274 = vmatprep.subr.mxu0 0.0
    %2275 = vmatpush1.msra.mxu0 0.0
    %2276 = vmatprep.subr.mxu0 0.0
    %2277 = vmatpush1.msra.mxu0 0.0
    %2278 = vmatprep.subr.mxu0 0.0
    %2279 = vmatpush1.msra.mxu0 0.0
    %2280 = vmatprep.subr.mxu0 0.0
    %2281 = vmatpush1.msra.mxu0 0.0
    %2282 = vmatprep.subr.mxu0 0.0
    %2283 = vmatpush1.msra.mxu0 0.0
    %2284 = vmatprep.subr.mxu0 0.0
    %2285 = vmatpush1.msra.mxu0 0.0
    %2286 = vmatprep.subr.mxu0 0.0
    %2287 = vmatpush1.msra.mxu0 0.0
    %2288 = vmatprep.subr.mxu0 0.0
    %2289 = vmatpush1.msra.mxu0 0.0
    %2290 = vmatprep.subr.mxu0 0.0
    %2291 = vmatpush1.msra.mxu0 0.0
    %2292 = vmatprep.subr.mxu0 0.0
    %2293 = vmatpush1.msra.mxu0 0.0
    %2294 = vmatprep.subr.mxu0 0.0
    %2295 = vmatpush1.msra.mxu0 0.0
    %2296 = vmatprep.subr.mxu0 0.0
    %2297 = vmatpush1.msra.mxu0 0.0
    %2298 = vmatprep.subr.mxu0 0.0
    %2299 = vmatpush1.msra.mxu0 0.0
    %2300 = vmatprep.subr.mxu0 0.0
    %2301 = vmatpush1.msra.mxu0 0.0
    %2302 = vmatprep.subr.mxu0 0.0
    %2303 = vmatpush1.msra.mxu0 0.0
    %2304 = vmatprep.subr.mxu0 0.0
    %2305 = vmatpush1.msra.mxu0 0.0
    %2306 = vmatprep.subr.mxu0 0.0
    %2307 = vmatpush1.msra.mxu0 0.0
    %2308 = vmatprep.subr.mxu0 0.0
    %2309 = vmatpush1.msra.mxu0 0.0
    %2310 = vmatprep.subr.mxu0 0.0
    %2311 = vmatpush1.msra.mxu0 0.0
    %2312 = vmatprep.subr.mxu0 0.0
    %2313 = vmatpush1.msra.mxu0 0.0
    %2314 = vmatprep.subr.mxu0 0.0
    %2315 = vmatpush1.msra.mxu0 0.0
    %2316 = vmatprep.subr.mxu0 0.0
    %2317 = vmatpush1.msra.mxu0 0.0
    %2318 = vmatprep.subr.mxu0 0.0
    %2319 = vmatpush1.msra.mxu0 0.0
    %2320 = vmatprep.mubr.f32.mxu0 0.0
    %2321 = vmatmul.mubr.f32.gmra.mrb[0].mxu0 %v2254
    %v2322 = vpop.f32.mrb[0].mxu0
    %v2323 = vadd.f32 %v232, %v2322
    %v2324 = vpop.f32.mrb[0].mxu0
    %2325 = vdwg.mxu0
    %2326 = vrot.lane.b32.xlu0 %v2245, 32
    %v2327 = vpop.permute.xlu0 %2326
    %v2328 = vsel %vm235, %v2327, 0
    %2330 = vmatprep.subr.mxu0 0.0
    %2331 = vmatpush1.msra.mxu0 %v70
    %2332 = vmatprep.subr.mxu0 0.0
    %2333 = vmatpush1.msra.mxu0 %v71
    %2334 = vmatprep.subr.mxu0 0.0
    %2335 = vmatpush1.msra.mxu0 %v72
    %2336 = vmatprep.subr.mxu0 0.0
    %2337 = vmatpush1.msra.mxu0 %v73
    %2338 = vmatprep.subr.mxu0 0.0
    %2339 = vmatpush1.msra.mxu0 0.0
    %2340 = vmatprep.subr.mxu0 0.0
    %2341 = vmatpush1.msra.mxu0 0.0
    %2342 = vmatprep.subr.mxu0 0.0
    %2343 = vmatpush1.msra.mxu0 0.0
    %2344 = vmatprep.subr.mxu0 0.0
    %2345 = vmatpush1.msra.mxu0 0.0
    %2346 = vmatprep.subr.mxu0 0.0
    %2347 = vmatpush1.msra.mxu0 0.0
    %2348 = vmatprep.subr.mxu0 0.0
    %2349 = vmatpush1.msra.mxu0 0.0
    %2350 = vmatprep.subr.mxu0 0.0
    %2351 = vmatpush1.msra.mxu0 0.0
    %2352 = vmatprep.subr.mxu0 0.0
    %2353 = vmatpush1.msra.mxu0 0.0
    %2354 = vmatprep.subr.mxu0 0.0
    %2355 = vmatpush1.msra.mxu0 0.0
    %2356 = vmatprep.subr.mxu0 0.0
    %2357 = vmatpush1.msra.mxu0 0.0
    %2358 = vmatprep.subr.mxu0 0.0
    %2359 = vmatpush1.msra.mxu0 0.0
    %2360 = vmatprep.subr.mxu0 0.0
    %2361 = vmatpush1.msra.mxu0 0.0
    %2362 = vmatprep.subr.mxu0 0.0
    %2363 = vmatpush1.msra.mxu0 0.0
    %2364 = vmatprep.subr.mxu0 0.0
    %2365 = vmatpush1.msra.mxu0 0.0
    %2366 = vmatprep.subr.mxu0 0.0
    %2367 = vmatpush1.msra.mxu0 0.0
    %2368 = vmatprep.subr.mxu0 0.0
    %2369 = vmatpush1.msra.mxu0 0.0
    %2370 = vmatprep.subr.mxu0 0.0
    %2371 = vmatpush1.msra.mxu0 0.0
    %2372 = vmatprep.subr.mxu0 0.0
    %2373 = vmatpush1.msra.mxu0 0.0
    %2374 = vmatprep.subr.mxu0 0.0
    %2375 = vmatpush1.msra.mxu0 0.0
    %2376 = vmatprep.subr.mxu0 0.0
    %2377 = vmatpush1.msra.mxu0 0.0
    %2378 = vmatprep.subr.mxu0 0.0
    %2379 = vmatpush1.msra.mxu0 0.0
    %2380 = vmatprep.subr.mxu0 0.0
    %2381 = vmatpush1.msra.mxu0 0.0
    %2382 = vmatprep.subr.mxu0 0.0
    %2383 = vmatpush1.msra.mxu0 0.0
    %2384 = vmatprep.subr.mxu0 0.0
    %2385 = vmatpush1.msra.mxu0 0.0
    %2386 = vmatprep.subr.mxu0 0.0
    %2387 = vmatpush1.msra.mxu0 0.0
    %2388 = vmatprep.subr.mxu0 0.0
    %2389 = vmatpush1.msra.mxu0 0.0
    %2390 = vmatprep.subr.mxu0 0.0
    %2391 = vmatpush1.msra.mxu0 0.0
    %2392 = vmatprep.subr.mxu0 0.0
    %2393 = vmatpush1.msra.mxu0 0.0
    %2394 = vmatprep.mubr.f32.mxu0 0.0
    %2395 = vmatmul.mubr.f32.gmra.mrb[0].mxu0 %v2328
    %v2396 = vpop.f32.mrb[0].mxu0
    %v2397 = vadd.f32 0.0, %v2396
    %v2398 = vpop.f32.mrb[0].mxu0
    %2399 = vdwg.mxu0
    %v2400 = vadd.f32 %v2323, %v2397
    %v2401 = vxor.u32 %v2400, 2147483648
    %v2402 = vmul.f32 %v2401, 1.442695
    %v2403 = vpow.pop %v2402
    %v2404 = vadd.f32 %v2403, 1.0
    %v2405 = vrcp.pop %v2404
    %v2406 = vmul.f32 1.0, %v2405
    %v2407 = vtanh.pop %v2400
    %v2408 = vmul.f32 %v2406, %v2239
    %2410 = vrot.lane.b32.xlu0 %v2407, 64
    %v2411 = vpop.permute.xlu0 %2410
    %v2413 = vmul.f32 %v2406, %v2411
    %2415 = vrot.lane.b32.xlu0 %v2413, 32
    %v2416 = vpop.permute.xlu0 %2415
    %v2418 = vadd.f32 %v2408, %v2416
    %v2419 = vtanh.pop %v2418
    %2421 = vrot.lane.b32.xlu0 %v2419, 64
    %v2422 = vpop.permute.xlu0 %2421
    %v2424 = vmul.f32 %v2406, %v2422
    %2425 = vst.msk [vmem:[#allocation3 + $0x8] sm:$0xff] %vm1425, %v2424
    %v2426 = vld [vmem:[#allocation3] sm:$0xff]
    %v2427 = vld [vmem:[#allocation3 + $0x8] sm:$0xff]
    %v2428 = vld [vmem:[%s7] sm:$0xff]
    %v2429 = vld [vmem:[%s7 + $0x8] sm:$0xff]
    %v2430 = vld [vmem:[%s7 + $0x10] sm:$0xff]
    %v2431 = vld [vmem:[%s7 + $0x18] sm:$0xff]
    %v2432 = vld [vmem:[%s7 + $0x20] sm:$0xff]
    %v2433 = vld [vmem:[%s7 + $0x28] sm:$0xff]
    %v2434 = vld [vmem:[%s7 + $0x30] sm:$0xff]
    %v2435 = vld [vmem:[%s7 + $0x38] sm:$0xff]
    %v2436 = vld [vmem:[%s7 + $0x40] sm:$0xff]
    %v2437 = vld [vmem:[%s7 + $0x48] sm:$0xff]
    %v2438 = vld [vmem:[%s7 + $0x50] sm:$0xff]
    %v2439 = vld [vmem:[%s7 + $0x58] sm:$0xff]
    %v2440 = vld [vmem:[%s7 + $0x60] sm:$0xff]
    %v2441 = vld [vmem:[%s7 + $0x68] sm:$0xff]
    %v2442 = vld [vmem:[%s7 + $0x70] sm:$0xff]
    %v2443 = vld [vmem:[%s7 + $0x78] sm:$0xff]
    %v2444 = vld [vmem:[%s7 + $0x80] sm:$0xff]
    %v2445 = vld [vmem:[%s7 + $0x88] sm:$0xff]
    %v2446 = vld [vmem:[%s7 + $0x90] sm:$0xff]
    %v2447 = vld [vmem:[%s7 + $0x98] sm:$0xff]
    %v2448 = vld [vmem:[%s7 + $0xa0] sm:$0xff]
    %v2449 = vld [vmem:[%s7 + $0xa8] sm:$0xff]
    %v2450 = vld [vmem:[%s7 + $0xb0] sm:$0xff]
    %v2451 = vld [vmem:[%s7 + $0xb8] sm:$0xff]
    %v2452 = vld [vmem:[%s7 + $0xc0] sm:$0xff]
    %v2453 = vld [vmem:[%s7 + $0xc8] sm:$0xff]
    %v2454 = vld [vmem:[%s7 + $0xd0] sm:$0xff]
    %v2455 = vld [vmem:[%s7 + $0xd8] sm:$0xff]
    %v2456 = vld [vmem:[%s7 + $0xe0] sm:$0xff]
    %v2457 = vld [vmem:[%s7 + $0xe8] sm:$0xff]
    %v2458 = vld [vmem:[%s7 + $0xf0] sm:$0xff]
    %v2459 = vld [vmem:[%s7 + $0xf8] sm:$0xff]
    %v2460 = vld [vmem:[%s8] sm:$0x1]
    %v2462 = vlaneseq
    %v2463 = vshrl.u32 %v2462, 7
    %v2464 = vsub.s32 0, %v2463
    %v2465 = vrot.slane %v2460, %v2464
    %2467 = vmatprep.subr.mxu0 0.0
    %2468 = vmatpush1.msra.mxu0 %v2428
    %2469 = vmatprep.subr.mxu0 0.0
    %2470 = vmatpush1.msra.mxu0 %v2429
    %2471 = vmatprep.subr.mxu0 0.0
    %2472 = vmatpush1.msra.mxu0 %v2430
    %2473 = vmatprep.subr.mxu0 0.0
    %2474 = vmatpush1.msra.mxu0 %v2431
    %2475 = vmatprep.subr.mxu0 0.0
    %2476 = vmatpush1.msra.mxu0 %v2432
    %2477 = vmatprep.subr.mxu0 0.0
    %2478 = vmatpush1.msra.mxu0 %v2433
    %2479 = vmatprep.subr.mxu0 0.0
    %2480 = vmatpush1.msra.mxu0 %v2434
    %2481 = vmatprep.subr.mxu0 0.0
    %2482 = vmatpush1.msra.mxu0 %v2435
    %2483 = vmatprep.subr.mxu0 0.0
    %2484 = vmatpush1.msra.mxu0 %v2436
    %2485 = vmatprep.subr.mxu0 0.0
    %2486 = vmatpush1.msra.mxu0 %v2437
    %2487 = vmatprep.subr.mxu0 0.0
    %2488 = vmatpush1.msra.mxu0 %v2438
    %2489 = vmatprep.subr.mxu0 0.0
    %2490 = vmatpush1.msra.mxu0 %v2439
    %2491 = vmatprep.subr.mxu0 0.0
    %2492 = vmatpush1.msra.mxu0 %v2440
    %2493 = vmatprep.subr.mxu0 0.0
    %2494 = vmatpush1.msra.mxu0 %v2441
    %2495 = vmatprep.subr.mxu0 0.0
    %2496 = vmatpush1.msra.mxu0 %v2442
    %2497 = vmatprep.subr.mxu0 0.0
    %2498 = vmatpush1.msra.mxu0 %v2443
    %2499 = vmatprep.subr.mxu0 0.0
    %2500 = vmatpush1.msra.mxu0 %v2444
    %2501 = vmatprep.subr.mxu0 0.0
    %2502 = vmatpush1.msra.mxu0 %v2445
    %2503 = vmatprep.subr.mxu0 0.0
    %2504 = vmatpush1.msra.mxu0 %v2446
    %2505 = vmatprep.subr.mxu0 0.0
    %2506 = vmatpush1.msra.mxu0 %v2447
    %2507 = vmatprep.subr.mxu0 0.0
    %2508 = vmatpush1.msra.mxu0 %v2448
    %2509 = vmatprep.subr.mxu0 0.0
    %2510 = vmatpush1.msra.mxu0 %v2449
    %2511 = vmatprep.subr.mxu0 0.0
    %2512 = vmatpush1.msra.mxu0 %v2450
    %2513 = vmatprep.subr.mxu0 0.0
    %2514 = vmatpush1.msra.mxu0 %v2451
    %2515 = vmatprep.subr.mxu0 0.0
    %2516 = vmatpush1.msra.mxu0 %v2452
    %2517 = vmatprep.subr.mxu0 0.0
    %2518 = vmatpush1.msra.mxu0 %v2453
    %2519 = vmatprep.subr.mxu0 0.0
    %2520 = vmatpush1.msra.mxu0 %v2454
    %2521 = vmatprep.subr.mxu0 0.0
    %2522 = vmatpush1.msra.mxu0 %v2455
    %2523 = vmatprep.subr.mxu0 0.0
    %2524 = vmatpush1.msra.mxu0 %v2456
    %2525 = vmatprep.subr.mxu0 0.0
    %2526 = vmatpush1.msra.mxu0 %v2457
    %2527 = vmatprep.subr.mxu0 0.0
    %2528 = vmatpush1.msra.mxu0 %v2458
    %2529 = vmatprep.subr.mxu0 0.0
    %2530 = vmatpush1.msra.mxu0 %v2459
    %2531 = vmatprep.mubr.f32.mxu0 %v2427
    %2532 = vmatmul.mubr.f32.gmra.mrb[0].mxu0 %v2426
    %v2533 = vpop.f32.mrb[0].mxu0
    %v2534 = vadd.f32 %v2465, %v2533
    %v2535 = vpop.f32.mrb[0].mxu0
    %2536 = vdwg.mxu0
    %v2537 = vxor.u32 %v2534, 2147483648
    %v2538 = vmul.f32 %v2537, 1.442695
    %v2539 = vpow.pop %v2538
    %v2540 = vadd.f32 %v2539, 1.0
    %v2541 = vrcp.pop %v2540
    %v2542 = vmul.f32 1.0, %v2541
    %2543 = vst [vmem:[%s9] sm:$0xff] %v2542
    // Predicated region
    $region46: #{forward.1} parent=1 // pred_check
      _
    $region47: #{forward.1} parent=1 // pred_check_branch
      %2545 = sbr.rel (0) target = $region49
    $region48: #{forward.1} parent=1 // pred_region
      _
    $region49: #{forward.1} parent=1 // pred_fallthru
      _
    // Predicated region
    $region50: #{forward.1} parent=1 // pred_check
      _
    $region51: #{forward.1} parent=1 // pred_check_branch
      %2547 = sbr.rel (0) target = $region53
    $region52: #{forward.1} parent=1 // pred_region
      _
    $region53: #{forward.1} parent=1 // pred_fallthru
      _
    %2548 = vsyncpa [#allocation5], 1
    %2549 = vsyncpa [#allocation7], 1

</llo_original>
